<compile_context>
chip_gen: v7x
topology: tpu7x:2x2x1
jax: 0.10.0
libtpu: 0.0.40
codegen_flags: <defaults>
</compile_context>

<pallas_src>
import math

import jax
import jax.numpy as jnp
from jax import lax
from jax.experimental import pallas as pl
from jax.experimental.pallas import tpu as pltpu

EPS = 1e-5
_GELU_C = math.sqrt(2.0 / math.pi)
_NEG_BIG = -1e30


# ----------------------------------------------------------------------------
# Small helpers
# ----------------------------------------------------------------------------
def _layernorm_f32(x_f32, scale_f32, shift_f32):
    """x: (rows, d) f32; scale/shift: (1, d) f32. Two-pass (stable) variance."""
    mean = jnp.mean(x_f32, axis=-1, keepdims=True)
    xc = x_f32 - mean
    var = jnp.mean(xc * xc, axis=-1, keepdims=True)   # unbiased=False
    return scale_f32 * (xc * lax.rsqrt(var + EPS)) + shift_f32


def _gelu_tanh_f32(x_f32):
    """GELU, tanh approximation (matches the PyTorch GELU module)."""
    return 0.5 * x_f32 * (
        1.0 + jnp.tanh(jnp.float32(_GELU_C) *
                       (x_f32 + 0.044715 * x_f32 * x_f32 * x_f32)))


def _const_index_map(ndim):
    zeros = (0,) * ndim
    return lambda i: zeros


def _vmem_limit_bytes():
    """Per-generation VMEM budget (leave headroom for internal scratch)."""
    cap = None
    try:
        cap = pltpu.get_tpu_info().vmem_capacity_bytes
    except Exception:
        cap = None
    if not cap:
        cap = 64 * 1024 * 1024          # conservative: v7x per-core VMEM
    return int(min(cap * 5 // 8, 100 * 1024 * 1024))


_BUFFERED_OK = None


def _probe_copy_kernel(x_ref, o_ref):
    o_ref[...] = x_ref[...]


def _single_buffer_supported():
    """Probe once whether pipeline_mode=pl.Buffered(1) works on this build."""
    global _BUFFERED_OK
    if _BUFFERED_OK is not None:
        return _BUFFERED_OK
    ok = False
    if hasattr(pl, "Buffered"):
        try:
            probe = pl.pallas_call(
                _probe_copy_kernel,
                out_shape=jax.ShapeDtypeStruct((16, 128), jnp.float32),
                grid=(2,),
                in_specs=[pl.BlockSpec((8, 128), lambda i: (0, 0),
                                       pipeline_mode=pl.Buffered(1))],
                out_specs=pl.BlockSpec((8, 128), lambda i: (i, 0)),
            )
            jax.block_until_ready(probe(jnp.zeros((8, 128), jnp.float32)))
            ok = True
        except Exception:
            ok = False
    _BUFFERED_OK = ok
    return ok


# ----------------------------------------------------------------------------
# Fused kernel: one batch element per grid step
#   LN1 -> causal MHA -> out-proj -> +residual -> LN2 -> FFN -> +residual
# ----------------------------------------------------------------------------
def transformer_block_kernel(x_ref, g1_ref, s1_ref,
                             wq_ref, wk_ref, wv_ref, wo_ref, bo_ref,
                             g2_ref, s2_ref, w1_ref, fb1_ref, w2_ref, fb2_ref,
                             o_ref):
    x = x_ref[0]                                   # (seq, d), input dtype
    seq, d = x.shape
    num_heads, head_dim, _ = wq_ref.shape

    mm = wq_ref.dtype                              # matmul operand dtype
    xf = x.astype(jnp.float32)

    # ---- LayerNorm 1 (f32 math) -------------------------------------------
    ln1 = _layernorm_f32(xf, g1_ref[...].astype(jnp.float32),
                         s1_ref[...].astype(jnp.float32)).astype(mm)

    # ---- causal mask + scale ----------------------------------------------
    row = lax.broadcasted_iota(jnp.int32, (seq, seq), 0)
    col = lax.broadcasted_iota(jnp.int32, (seq, seq), 1)
    keep = col <= row
    inv_sqrt_hd = jnp.float32(1.0 / math.sqrt(head_dim))

    # ---- per-head attention (rolled loop: bounded live ranges) -------------
    def head_body(h, acc):
        wq = wq_ref[h]                             # (head_dim, d) pre-sliced
        wk = wk_ref[h]
        wv = wv_ref[h]
        wo = wo_ref[h]
        # q/k/v projections: full-depth d contraction, f32 accumulation.
        qh = lax.dot_general(ln1, wq, (((1,), (1,)), ((), ())),
                             preferred_element_type=jnp.float32)
        kh = lax.dot_general(ln1, wk, (((1,), (1,)), ((), ())),
                             preferred_element_type=jnp.float32)
        vh = lax.dot_general(ln1, wv, (((1,), (1,)), ((), ())),
                             preferred_element_type=jnp.float32)
        # scores = qh @ kh^T (no explicit transpose)
        s = lax.dot_general(qh.astype(mm), kh.astype(mm),
                            (((1,), (1,)), ((), ())),
                            preferred_element_type=jnp.float32)
        s = s * inv_sqrt_hd
        s = jnp.where(keep, s, jnp.float32(_NEG_BIG))
        s = s - jnp.max(s, axis=-1, keepdims=True)
        p = jnp.exp(s)
        p = p * pl.reciprocal(jnp.sum(p, axis=-1, keepdims=True), approx=True)
        ctx = jnp.dot(p.astype(mm), vh.astype(mm),
                      preferred_element_type=jnp.float32)
        contrib = jnp.dot(ctx.astype(mm), wo,
                          preferred_element_type=jnp.float32)
        return acc + contrib

    attn = lax.fori_loop(0, num_heads, head_body,
                         jnp.zeros((seq, d), jnp.float32))
    attn = attn + bo_ref[...].astype(jnp.float32)

    x1 = attn + xf                                  # residual 1 (kept in f32)

    # ---- LayerNorm 2 + FeedForward (Linear -> GELU -> Linear) --------------
    ln2 = _layernorm_f32(x1, g2_ref[...].astype(jnp.float32),
                         s2_ref[...].astype(jnp.float32)).astype(mm)
    h1 = jnp.dot(ln2, w1_ref[...], preferred_element_type=jnp.float32)
    h1 = _gelu_tanh_f32(h1 + fb1_ref[...].astype(jnp.float32))
    h2 = jnp.dot(h1.astype(mm), w2_ref[...], preferred_element_type=jnp.float32)
    h2 = h2 + fb2_ref[...].astype(jnp.float32)

    o_ref[0] = (h2 + x1).astype(o_ref.dtype)        # residual 2


# ----------------------------------------------------------------------------
# Wrapper
# ----------------------------------------------------------------------------
def transformer_block(x, params, *, num_heads, matmul_dtype=None):
    """x: (batch, seq, emb_dim).  params: dict of weights (see __main__)."""
    b, s, d = x.shape
    assert d % num_heads == 0, "emb_dim must be divisible by num_heads"
    hd = d // num_heads
    mm = jnp.dtype(matmul_dtype) if matmul_dtype is not None else x.dtype

    # Host-side per-head weight layout (pure relayout, done once by XLA):
    #   wq/wk/wv: (d, d) -> (H, head_dim, d)  so the kernel computes A @ B^T
    #   wo:       (d, d) -> (H, head_dim, d)  (row blocks per head)
    def qkv_heads(w):
        return jnp.transpose(w.reshape(d, num_heads, hd), (1, 2, 0)).astype(mm)

    wq_h = qkv_heads(params["wq"])
    wk_h = qkv_heads(params["wk"])
    wv_h = qkv_heads(params["wv"])
    wo_h = params["wo"].reshape(num_heads, hd, d).astype(mm)
    w1 = params["w1"].astype(mm)
    w2 = params["w2"].astype(mm)

    g1 = params["ln1_scale"].reshape(1, d)
    s1 = params["ln1_shift"].reshape(1, d)
    g2 = params["ln2_scale"].reshape(1, d)
    s2 = params["ln2_shift"].reshape(1, d)
    bo = params["bo"].reshape(1, d)
    b1 = params["b1"].reshape(1, 4 * d)
    b2 = params["b2"].reshape(1, d)

    single_buf = _single_buffer_supported()

    def const_spec(shape):
        imap = _const_index_map(len(shape))
        if single_buf:
            # Constant-index operands: single-buffer (double-buffering them is
            # pure VMEM waste — matters once d grows on v7x's 64 MiB VMEM).
            return pl.BlockSpec(shape, imap, pipeline_mode=pl.Buffered(1))
        return pl.BlockSpec(shape, imap)

    in_specs = [
        pl.BlockSpec((1, s, d), lambda i: (i, 0, 0)),   # x
        const_spec((1, d)),                             # ln1 scale
        const_spec((1, d)),                             # ln1 shift
        const_spec((num_heads, hd, d)),                 # wq (per-head, B^T)
        const_spec((num_heads, hd, d)),                 # wk
        const_spec((num_heads, hd, d)),                 # wv
        const_spec((num_heads, hd, d)),                 # wo (per-head rows)
        const_spec((1, d)),                             # bo
        const_spec((1, d)),                             # ln2 scale
        const_spec((1, d)),                             # ln2 shift
        const_spec((d, 4 * d)),                         # w1
        const_spec((1, 4 * d)),                         # b1
        const_spec((4 * d, d)),                         # w2
        const_spec((1, d)),                             # b2
    ]

    return pl.pallas_call(
        transformer_block_kernel,
        out_shape=jax.ShapeDtypeStruct((b, s, d), x.dtype),
        grid_spec=pltpu.PrefetchScalarGridSpec(
            num_scalar_prefetch=0,
            grid=(b,),
            in_specs=in_specs,
            out_specs=pl.BlockSpec((1, s, d), lambda i: (i, 0, 0)),
        ),
        compiler_params=pltpu.CompilerParams(
            dimension_semantics=("parallel",),
            vmem_limit_bytes=_vmem_limit_bytes(),
        ),
    )(x, g1, s1, wq_h, wk_h, wv_h, wo_h, bo, g2, s2, w1, b1, w2, b2)


# ----------------------------------------------------------------------------
# Pure-JAX reference (mirrors the PyTorch forward, dropout = identity)
# ----------------------------------------------------------------------------
def transformer_block_ref(x, params, *, num_heads):
    b, s, d = x.shape
    hd = d // num_heads

    def ln(v, scale, shift):
        vf = v.astype(jnp.float32)
        mean = jnp.mean(vf, axis=-1, keepdims=True)
        var = jnp.mean((vf - mean) ** 2, axis=-1, keepdims=True)
        return scale * (vf - mean) / jnp.sqrt(var + EPS) + shift

    shortcut = x.astype(jnp.float32)
    h = ln(x, params["ln1_scale"], params["ln1_shift"])
    q = h @ params["wq"]
    k = h @ params["wk"]
    v = h @ params["wv"]
    q = q.reshape(b, s, num_heads, hd).transpose(0, 2, 1, 3)
    k = k.reshape(b, s, num_heads, hd).transpose(0, 2, 1, 3)
    v = v.reshape(b, s, num_heads, hd).transpose(0, 2, 1, 3)
    scores = jnp.einsum("bhqd,bhkd->bhqk", q, k) / jnp.sqrt(jnp.float32(hd))
    mask = jnp.triu(jnp.ones((s, s), dtype=bool), k=1)
    scores = jnp.where(mask, -jnp.inf, scores)
    w = jax.nn.softmax(scores, axis=-1)
    ctx = jnp.einsum("bhqk,bhkd->bhqd", w, v).transpose(0, 2, 1, 3).reshape(b, s, d)
    attn = ctx @ params["wo"] + params["bo"]
    x1 = attn + shortcut

    h2 = ln(x1, params["ln2_scale"], params["ln2_shift"])
    f = h2 @ params["w1"] + params["b1"]
    f = 0.5 * f * (1.0 + jnp.tanh(_GELU_C * (f + 0.044715 * f ** 3)))
    f = f @ params["w2"] + params["b2"]
    return (f + x1).astype(x.dtype)


if __name__ == "__main__":
    batch, seq, emb_dim, n_heads = 2, 8, 128, 4

    key = jax.random.PRNGKey(0)
    ks = jax.random.split(key, 10)
    x = jax.random.normal(ks[0], (batch, seq, emb_dim), dtype=jnp.float32)

    params = {
        "ln1_scale": jnp.ones((emb_dim,), jnp.float32),
        "ln1_shift": jnp.zeros((emb_dim,), jnp.float32),
        "ln2_scale": jnp.ones((emb_dim,), jnp.float32),
        "ln2_shift": jnp.zeros((emb_dim,), jnp.float32),
        "wq": 0.02 * jax.random.normal(ks[1], (emb_dim, emb_dim), jnp.float32),
        "wk": 0.02 * jax.random.normal(ks[2], (emb_dim, emb_dim), jnp.float32),
        "wv": 0.02 * jax.random.normal(ks[3], (emb_dim, emb_dim), jnp.float32),
        "wo": 0.02 * jax.random.normal(ks[4], (emb_dim, emb_dim), jnp.float32),
        "bo": 0.01 * jax.random.normal(ks[5], (emb_dim,), jnp.float32),
        "w1": 0.02 * jax.random.normal(ks[6], (emb_dim, 4 * emb_dim), jnp.float32),
        "b1": 0.01 * jax.random.normal(ks[7], (4 * emb_dim,), jnp.float32),
        "w2": 0.02 * jax.random.normal(ks[8], (4 * emb_dim, emb_dim), jnp.float32),
        "b2": 0.01 * jax.random.normal(ks[9], (emb_dim,), jnp.float32),
    }

    out = transformer_block(x, params, num_heads=n_heads)
    out = jax.block_until_ready(out)

    ref = transformer_block_ref(x, params, num_heads=n_heads)
    assert out.shape == x.shape and out.dtype == x.dtype
    assert jnp.allclose(out, ref, atol=2e-3, rtol=2e-3), float(
        jnp.max(jnp.abs(out - ref)))

    print("KERNEL_OK")
</pallas_src>

<mosaic_0001>
module attributes {stable_mosaic.version = 11 : i64} {
  func.func @_probe_copy_kernel(%arg0: i32, %arg1: memref<8x128xf32, #tpu.memory_space<vmem>>, %arg2: memref<8x128xf32, #tpu.memory_space<vmem>>) attributes {dimension_semantics = [#tpu.dimension_semantics<arbitrary>], iteration_bounds = array<i64: 2>, scalar_prefetch = 0 : i64, scratch_operands = 0 : i64, tpu.core_type = #tpu.core_type<tc>, window_params = [{pipeline_mode = #tpu.pipeline_mode<synchronous>, transform_indices = @transform_0, window_bounds = array<i64: 8, 128>}, {transform_indices = @transform_1, window_bounds = array<i64: 8, 128>}]} {
    %c0 = arith.constant 0 : index
    %c0_0 = arith.constant 0 : index
    %0 = vector.load %arg1[%c0, %c0_0] : memref<8x128xf32, #tpu.memory_space<vmem>>, vector<8x128xf32>
    %c0_1 = arith.constant 0 : index
    %c0_2 = arith.constant 0 : index
    %1 = vector.load %arg2[%c0_1, %c0_2] : memref<8x128xf32, #tpu.memory_space<vmem>>, vector<8x128xf32>
    tpu.vector_store %arg2[%c0_1, %c0_2], %0 {strides = array<i32>} : memref<8x128xf32, #tpu.memory_space<vmem>>, vector<8x128xf32>,
    return
  }
  func.func @transform_0(%arg0: i32) -> (i32, i32) {
    %c0_i32 = arith.constant 0 : i32
    %c0_i32_0 = arith.constant 0 : i32
    %c0_i32_1 = arith.constant 0 : i32
    return %c0_i32, %c0_i32_0 : i32, i32
  }
  func.func @transform_1(%arg0: i32) -> (i32, i32) {
    %c0_i32 = arith.constant 0 : i32
    %c0_i32_0 = arith.constant 0 : i32
    return %arg0, %c0_i32 : i32, i32
  }
}

module attributes {stable_mosaic.version = 11 : i64} {
  func.func @transformer_block_kernel(%arg0: i32, %arg1: memref<1x8x128xf32, #tpu.memory_space<vmem>>, %arg2: memref<1x128xf32, #tpu.memory_space<vmem>>, %arg3: memref<1x128xf32, #tpu.memory_space<vmem>>, %arg4: memref<4x32x128xf32, #tpu.memory_space<vmem>>, %arg5: memref<4x32x128xf32, #tpu.memory_space<vmem>>, %arg6: memref<4x32x128xf32, #tpu.memory_space<vmem>>, %arg7: memref<4x32x128xf32, #tpu.memory_space<vmem>>, %arg8: memref<1x128xf32, #tpu.memory_space<vmem>>, %arg9: memref<1x128xf32, #tpu.memory_space<vmem>>, %arg10: memref<1x128xf32, #tpu.memory_space<vmem>>, %arg11: memref<128x512xf32, #tpu.memory_space<vmem>>, %arg12: memref<1x512xf32, #tpu.memory_space<vmem>>, %arg13: memref<512x128xf32, #tpu.memory_space<vmem>>, %arg14: memref<1x128xf32, #tpu.memory_space<vmem>>, %arg15: memref<1x8x128xf32, #tpu.memory_space<vmem>>) attributes {dimension_semantics = [#tpu.dimension_semantics<parallel>], iteration_bounds = array<i64: 2>, scalar_prefetch = 0 : i64, scratch_operands = 0 : i64, tpu.core_type = #tpu.core_type<tc>, window_params = [{transform_indices = @transform_0, window_bounds = array<i64: 1, 8, 128>}, {pipeline_mode = #tpu.pipeline_mode<synchronous>, transform_indices = @transform_1, window_bounds = array<i64: 1, 128>}, {pipeline_mode = #tpu.pipeline_mode<synchronous>, transform_indices = @transform_2, window_bounds = array<i64: 1, 128>}, {pipeline_mode = #tpu.pipeline_mode<synchronous>, transform_indices = @transform_3, window_bounds = array<i64: 4, 32, 128>}, {pipeline_mode = #tpu.pipeline_mode<synchronous>, transform_indices = @transform_4, window_bounds = array<i64: 4, 32, 128>}, {pipeline_mode = #tpu.pipeline_mode<synchronous>, transform_indices = @transform_5, window_bounds = array<i64: 4, 32, 128>}, {pipeline_mode = #tpu.pipeline_mode<synchronous>, transform_indices = @transform_6, window_bounds = array<i64: 4, 32, 128>}, {pipeline_mode = #tpu.pipeline_mode<synchronous>, transform_indices = @transform_7, window_bounds = array<i64: 1, 128>}, {pipeline_mode = #tpu.pipeline_mode<synchronous>, transform_indices = @transform_8, window_bounds = array<i64: 1, 128>}, {pipeline_mode = #tpu.pipeline_mode<synchronous>, transform_indices = @transform_9, window_bounds = array<i64: 1, 128>}, {pipeline_mode = #tpu.pipeline_mode<synchronous>, transform_indices = @transform_10, window_bounds = array<i64: 128, 512>}, {pipeline_mode = #tpu.pipeline_mode<synchronous>, transform_indices = @transform_11, window_bounds = array<i64: 1, 512>}, {pipeline_mode = #tpu.pipeline_mode<synchronous>, transform_indices = @transform_12, window_bounds = array<i64: 512, 128>}, {pipeline_mode = #tpu.pipeline_mode<synchronous>, transform_indices = @transform_13, window_bounds = array<i64: 1, 128>}, {transform_indices = @transform_14, window_bounds = array<i64: 1, 8, 128>}]} {
    %c0 = arith.constant 0 : index
    %c0_0 = arith.constant 0 : index
    %c0_1 = arith.constant 0 : index
    %0 = vector.load %arg1[%c0, %c0_0, %c0_1] : memref<1x8x128xf32, #tpu.memory_space<vmem>>, vector<1x8x128xf32>
    %1 = vector.shape_cast %0 : vector<1x8x128xf32> to vector<8x128xf32>
    %c0_2 = arith.constant 0 : index
    %c0_3 = arith.constant 0 : index
    %2 = vector.load %arg2[%c0_2, %c0_3] : memref<1x128xf32, #tpu.memory_space<vmem>>, vector<1x128xf32>
    %c0_4 = arith.constant 0 : index
    %c0_5 = arith.constant 0 : index
    %3 = vector.load %arg3[%c0_4, %c0_5] : memref<1x128xf32, #tpu.memory_space<vmem>>, vector<1x128xf32>
    %cst = arith.constant dense<0.000000e+00> : vector<8xf32>
    %4 = vector.multi_reduction <add>, %1, %cst [1] : vector<8x128xf32> to vector<8xf32>
    %5 = vector.shape_cast %4 : vector<8xf32> to vector<8x1xf32>
    %cst_6 = arith.constant 1.280000e+02 : f32
    %6 = vector.broadcast %cst_6 : f32 to vector<8x1xf32>
    %7 = arith.divf %5, %6 : vector<8x1xf32>
    %8 = vector.broadcast %7 : vector<8x1xf32> to vector<8x128xf32>
    %9 = arith.subf %1, %8 : vector<8x128xf32>
    %10 = arith.mulf %9, %9 : vector<8x128xf32>
    %cst_7 = arith.constant dense<0.000000e+00> : vector<8xf32>
    %11 = vector.multi_reduction <add>, %10, %cst_7 [1] : vector<8x128xf32> to vector<8xf32>
    %12 = vector.shape_cast %11 : vector<8xf32> to vector<8x1xf32>
    %cst_8 = arith.constant 1.280000e+02 : f32
    %13 = vector.broadcast %cst_8 : f32 to vector<8x1xf32>
    %14 = arith.divf %12, %13 : vector<8x1xf32>
    %cst_9 = arith.constant 9.99999974E-6 : f32
    %15 = vector.broadcast %cst_9 : f32 to vector<8x1xf32>
    %16 = arith.addf %14, %15 : vector<8x1xf32>
    %17 = math.rsqrt %16 : vector<8x1xf32>
    %18 = vector.broadcast %17 : vector<8x1xf32> to vector<8x128xf32>
    %19 = arith.mulf %9, %18 : vector<8x128xf32>
    %20 = vector.broadcast %2 : vector<1x128xf32> to vector<8x128xf32>
    %21 = arith.mulf %20, %19 : vector<8x128xf32>
    %22 = vector.broadcast %3 : vector<1x128xf32> to vector<8x128xf32>
    %23 = arith.addf %21, %22 : vector<8x128xf32>
    %24 = tpu.iota {dimensions = array<i32: 0>} : vector<8x8xi32>
    %25 = tpu.iota {dimensions = array<i32: 1>} : vector<8x8xi32>
    %26 = arith.cmpi sle, %25, %24 : vector<8x8xi32>
    %cst_10 = arith.constant 0.000000e+00 : f32
    %27 = vector.broadcast %cst_10 : f32 to vector<8x128xf32>
    %cst_11 = arith.constant 0.176776692 : f32
    %c0_i32 = arith.constant 0 : i32
    %c4_i32 = arith.constant 4 : i32
    %28 = arith.addi %c0_i32, %c4_i32 : i32
    %c1_i32 = arith.constant 1 : i32
    %29 = scf.for %arg16 = %c0_i32 to %28 step %c1_i32 iter_args(%arg17 = %27) -> (vector<8x128xf32>)  : i32 {
      %83 = arith.index_cast %arg16 : i32 to index
      %c0_41 = arith.constant 0 : index
      %c0_42 = arith.constant 0 : index
      %84 = vector.load %arg4[%83, %c0_41, %c0_42] : memref<4x32x128xf32, #tpu.memory_space<vmem>>, vector<1x32x128xf32>
      %85 = vector.shape_cast %84 : vector<1x32x128xf32> to vector<32x128xf32>
      %86 = arith.index_cast %arg16 : i32 to index
      %c0_43 = arith.constant 0 : index
      %c0_44 = arith.constant 0 : index
      %87 = vector.load %arg5[%86, %c0_43, %c0_44] : memref<4x32x128xf32, #tpu.memory_space<vmem>>, vector<1x32x128xf32>
      %88 = vector.shape_cast %87 : vector<1x32x128xf32> to vector<32x128xf32>
      %89 = arith.index_cast %arg16 : i32 to index
      %c0_45 = arith.constant 0 : index
      %c0_46 = arith.constant 0 : index
      %90 = vector.load %arg6[%89, %c0_45, %c0_46] : memref<4x32x128xf32, #tpu.memory_space<vmem>>, vector<1x32x128xf32>
      %91 = vector.shape_cast %90 : vector<1x32x128xf32> to vector<32x128xf32>
      %92 = arith.index_cast %arg16 : i32 to index
      %c0_47 = arith.constant 0 : index
      %c0_48 = arith.constant 0 : index
      %93 = vector.load %arg7[%92, %c0_47, %c0_48] : memref<4x32x128xf32, #tpu.memory_space<vmem>>, vector<1x32x128xf32>
      %94 = vector.shape_cast %93 : vector<1x32x128xf32> to vector<32x128xf32>
      %cst_49 = arith.constant dense<0.000000e+00> : vector<8x32xf32>
      %95 = tpu.matmul %23, %85, %cst_49 {dimension_numbers = #tpu.dot_dimension_numbers<[1], [1], [0], [0], [0, 0, 1, 0], [], []>} : vector<8x128xf32>, vector<32x128xf32>, vector<8x32xf32> -> vector<8x32xf32>
      %cst_50 = arith.constant dense<0.000000e+00> : vector<8x32xf32>
      %96 = tpu.matmul %23, %88, %cst_50 {dimension_numbers = #tpu.dot_dimension_numbers<[1], [1], [0], [0], [0, 0, 1, 0], [], []>} : vector<8x128xf32>, vector<32x128xf32>, vector<8x32xf32> -> vector<8x32xf32>
      %cst_51 = arith.constant dense<0.000000e+00> : vector<8x32xf32>
      %97 = tpu.matmul %23, %91, %cst_51 {dimension_numbers = #tpu.dot_dimension_numbers<[1], [1], [0], [0], [0, 0, 1, 0], [], []>} : vector<8x128xf32>, vector<32x128xf32>, vector<8x32xf32> -> vector<8x32xf32>
      %cst_52 = arith.constant dense<0.000000e+00> : vector<8x8xf32>
      %98 = tpu.matmul %95, %96, %cst_52 {dimension_numbers = #tpu.dot_dimension_numbers<[1], [1], [0], [0], [0, 0, 1, 0], [], []>} : vector<8x32xf32>, vector<8x32xf32>, vector<8x8xf32> -> vector<8x8xf32>
      %99 = vector.broadcast %cst_11 : f32 to vector<8x8xf32>
      %100 = arith.mulf %98, %99 : vector<8x8xf32>
      %cst_53 = arith.constant -1.000000e+30 : f32
      %101 = vector.broadcast %cst_53 : f32 to vector<8x8xf32>
      %102 = arith.select %26, %100, %101 : vector<8x8xi1>, vector<8x8xf32>
      %cst_54 = arith.constant dense<0xFF800000> : vector<8xf32>
      %103 = vector.multi_reduction <maximumf>, %102, %cst_54 [1] : vector<8x8xf32> to vector<8xf32>
      %104 = vector.shape_cast %103 : vector<8xf32> to vector<8x1xf32>
      %105 = vector.broadcast %104 : vector<8x1xf32> to vector<8x8xf32>
      %106 = arith.subf %102, %105 : vector<8x8xf32>
      %107 = math.exp %106 : vector<8x8xf32>
      %cst_55 = arith.constant dense<0.000000e+00> : vector<8xf32>
      %108 = vector.multi_reduction <add>, %107, %cst_55 [1] : vector<8x8xf32> to vector<8xf32>
      %109 = vector.shape_cast %108 : vector<8xf32> to vector<8x1xf32>
      %110 = tpu.reciprocal %109 {approx = true} : vector<8x1xf32> -> vector<8x1xf32>
      %111 = vector.broadcast %110 : vector<8x1xf32> to vector<8x8xf32>
      %112 = arith.mulf %107, %111 : vector<8x8xf32>
      %cst_56 = arith.constant dense<0.000000e+00> : vector<8x32xf32>
      %113 = tpu.matmul %112, %97, %cst_56 {dimension_numbers = #tpu.dot_dimension_numbers<[1], [0], [0], [1], [0, 0, 1, 1], [], []>} : vector<8x8xf32>, vector<8x32xf32>, vector<8x32xf32> -> vector<8x32xf32>
      %cst_57 = arith.constant dense<0.000000e+00> : vector<8x128xf32>
      %114 = tpu.matmul %113, %94, %cst_57 {dimension_numbers = #tpu.dot_dimension_numbers<[1], [0], [0], [1], [0, 0, 1, 1], [], []>} : vector<8x32xf32>, vector<32x128xf32>, vector<8x128xf32> -> vector<8x128xf32>
      %115 = arith.addf %arg17, %114 : vector<8x128xf32>
      scf.yield %115 : vector<8x128xf32>
    }
    %c4_i32_12 = arith.constant 4 : i32
    %c0_13 = arith.constant 0 : index
    %c0_14 = arith.constant 0 : index
    %30 = vector.load %arg8[%c0_13, %c0_14] : memref<1x128xf32, #tpu.memory_space<vmem>>, vector<1x128xf32>
    %31 = vector.broadcast %30 : vector<1x128xf32> to vector<8x128xf32>
    %32 = arith.addf %29, %31 : vector<8x128xf32>
    %33 = arith.addf %32, %1 : vector<8x128xf32>
    %c0_15 = arith.constant 0 : index
    %c0_16 = arith.constant 0 : index
    %34 = vector.load %arg9[%c0_15, %c0_16] : memref<1x128xf32, #tpu.memory_space<vmem>>, vector<1x128xf32>
    %c0_17 = arith.constant 0 : index
    %c0_18 = arith.constant 0 : index
    %35 = vector.load %arg10[%c0_17, %c0_18] : memref<1x128xf32, #tpu.memory_space<vmem>>, vector<1x128xf32>
    %cst_19 = arith.constant dense<0.000000e+00> : vector<8xf32>
    %36 = vector.multi_reduction <add>, %33, %cst_19 [1] : vector<8x128xf32> to vector<8xf32>
    %37 = vector.shape_cast %36 : vector<8xf32> to vector<8x1xf32>
    %cst_20 = arith.constant 1.280000e+02 : f32
    %38 = vector.broadcast %cst_20 : f32 to vector<8x1xf32>
    %39 = arith.divf %37, %38 : vector<8x1xf32>
    %40 = vector.broadcast %39 : vector<8x1xf32> to vector<8x128xf32>
    %41 = arith.subf %33, %40 : vector<8x128xf32>
    %42 = arith.mulf %41, %41 : vector<8x128xf32>
    %cst_21 = arith.constant dense<0.000000e+00> : vector<8xf32>
    %43 = vector.multi_reduction <add>, %42, %cst_21 [1] : vector<8x128xf32> to vector<8xf32>
    %44 = vector.shape_cast %43 : vector<8xf32> to vector<8x1xf32>
    %cst_22 = arith.constant 1.280000e+02 : f32
    %45 = vector.broadcast %cst_22 : f32 to vector<8x1xf32>
    %46 = arith.divf %44, %45 : vector<8x1xf32>
    %cst_23 = arith.constant 9.99999974E-6 : f32
    %47 = vector.broadcast %cst_23 : f32 to vector<8x1xf32>
    %48 = arith.addf %46, %47 : vector<8x1xf32>
    %49 = math.rsqrt %48 : vector<8x1xf32>
    %50 = vector.broadcast %49 : vector<8x1xf32> to vector<8x128xf32>
    %51 = arith.mulf %41, %50 : vector<8x128xf32>
    %52 = vector.broadcast %34 : vector<1x128xf32> to vector<8x128xf32>
    %53 = arith.mulf %52, %51 : vector<8x128xf32>
    %54 = vector.broadcast %35 : vector<1x128xf32> to vector<8x128xf32>
    %55 = arith.addf %53, %54 : vector<8x128xf32>
    %c0_24 = arith.constant 0 : index
    %c0_25 = arith.constant 0 : index
    %56 = vector.load %arg11[%c0_24, %c0_25] : memref<128x512xf32, #tpu.memory_space<vmem>>, vector<128x512xf32>
    %cst_26 = arith.constant dense<0.000000e+00> : vector<8x512xf32>
    %57 = tpu.matmul %55, %56, %cst_26 {dimension_numbers = #tpu.dot_dimension_numbers<[1], [0], [0], [1], [0, 0, 1, 1], [], []>} : vector<8x128xf32>, vector<128x512xf32>, vector<8x512xf32> -> vector<8x512xf32>
    %c0_27 = arith.constant 0 : index
    %c0_28 = arith.constant 0 : index
    %58 = vector.load %arg12[%c0_27, %c0_28] : memref<1x512xf32, #tpu.memory_space<vmem>>, vector<1x512xf32>
    %59 = vector.broadcast %58 : vector<1x512xf32> to vector<8x512xf32>
    %60 = arith.addf %57, %59 : vector<8x512xf32>
    %cst_29 = arith.constant 5.000000e-01 : f32
    %61 = vector.broadcast %cst_29 : f32 to vector<8x512xf32>
    %62 = arith.mulf %61, %60 : vector<8x512xf32>
    %cst_30 = arith.constant 4.471500e-02 : f32
    %63 = vector.broadcast %cst_30 : f32 to vector<8x512xf32>
    %64 = arith.mulf %63, %60 : vector<8x512xf32>
    %65 = arith.mulf %64, %60 : vector<8x512xf32>
    %66 = arith.mulf %65, %60 : vector<8x512xf32>
    %67 = arith.addf %60, %66 : vector<8x512xf32>
    %cst_31 = arith.constant 0.797884583 : f32
    %68 = vector.broadcast %cst_31 : f32 to vector<8x512xf32>
    %69 = arith.mulf %68, %67 : vector<8x512xf32>
    %70 = math.tanh %69 : vector<8x512xf32>
    %cst_32 = arith.constant 1.000000e+00 : f32
    %71 = vector.broadcast %cst_32 : f32 to vector<8x512xf32>
    %72 = arith.addf %71, %70 : vector<8x512xf32>
    %73 = arith.mulf %62, %72 : vector<8x512xf32>
    %c0_33 = arith.constant 0 : index
    %c0_34 = arith.constant 0 : index
    %74 = vector.load %arg13[%c0_33, %c0_34] : memref<512x128xf32, #tpu.memory_space<vmem>>, vector<512x128xf32>
    %cst_35 = arith.constant dense<0.000000e+00> : vector<8x128xf32>
    %75 = tpu.matmul %73, %74, %cst_35 {dimension_numbers = #tpu.dot_dimension_numbers<[1], [0], [0], [1], [0, 0, 1, 1], [], []>} : vector<8x512xf32>, vector<512x128xf32>, vector<8x128xf32> -> vector<8x128xf32>
    %c0_36 = arith.constant 0 : index
    %c0_37 = arith.constant 0 : index
    %76 = vector.load %arg14[%c0_36, %c0_37] : memref<1x128xf32, #tpu.memory_space<vmem>>, vector<1x128xf32>
    %77 = vector.broadcast %76 : vector<1x128xf32> to vector<8x128xf32>
    %78 = arith.addf %75, %77 : vector<8x128xf32>
    %79 = arith.addf %78, %33 : vector<8x128xf32>
    %c0_38 = arith.constant 0 : index
    %c0_39 = arith.constant 0 : index
    %c0_40 = arith.constant 0 : index
    %80 = vector.load %arg15[%c0_38, %c0_39, %c0_40] : memref<1x8x128xf32, #tpu.memory_space<vmem>>, vector<1x8x128xf32>
    %81 = vector.shape_cast %80 : vector<1x8x128xf32> to vector<8x128xf32>
    %82 = vector.shape_cast %79 : vector<8x128xf32> to vector<1x8x128xf32>
    tpu.vector_store %arg15[%c0_38, %c0_39, %c0_40], %82 {strides = array<i32>} : memref<1x8x128xf32, #tpu.memory_space<vmem>>, vector<1x8x128xf32>,
    return
  }
  func.func @transform_0(%arg0: i32) -> (i32, i32, i32) {
    %c0_i32 = arith.constant 0 : i32
    %c0_i32_0 = arith.constant 0 : i32
    %c0_i32_1 = arith.constant 0 : i32
    return %arg0, %c0_i32, %c0_i32_0 : i32, i32, i32
  }
  func.func @transform_1(%arg0: i32) -> (i32, i32) {
    %c0_i32 = arith.constant 0 : i32
    %c0_i32_0 = arith.constant 0 : i32
    %c0_i32_1 = arith.constant 0 : i32
    return %c0_i32, %c0_i32_0 : i32, i32
  }
  func.func @transform_2(%arg0: i32) -> (i32, i32) {
    %c0_i32 = arith.constant 0 : i32
    %c0_i32_0 = arith.constant 0 : i32
    %c0_i32_1 = arith.constant 0 : i32
    return %c0_i32, %c0_i32_0 : i32, i32
  }
  func.func @transform_3(%arg0: i32) -> (i32, i32, i32) {
    %c0_i32 = arith.constant 0 : i32
    %c0_i32_0 = arith.constant 0 : i32
    %c0_i32_1 = arith.constant 0 : i32
    %c0_i32_2 = arith.constant 0 : i32
    return %c0_i32, %c0_i32_0, %c0_i32_1 : i32, i32, i32
  }
  func.func @transform_4(%arg0: i32) -> (i32, i32, i32) {
    %c0_i32 = arith.constant 0 : i32
    %c0_i32_0 = arith.constant 0 : i32
    %c0_i32_1 = arith.constant 0 : i32
    %c0_i32_2 = arith.constant 0 : i32
    return %c0_i32, %c0_i32_0, %c0_i32_1 : i32, i32, i32
  }
  func.func @transform_5(%arg0: i32) -> (i32, i32, i32) {
    %c0_i32 = arith.constant 0 : i32
    %c0_i32_0 = arith.constant 0 : i32
    %c0_i32_1 = arith.constant 0 : i32
    %c0_i32_2 = arith.constant 0 : i32
    return %c0_i32, %c0_i32_0, %c0_i32_1 : i32, i32, i32
  }
  func.func @transform_6(%arg0: i32) -> (i32, i32, i32) {
    %c0_i32 = arith.constant 0 : i32
    %c0_i32_0 = arith.constant 0 : i32
    %c0_i32_1 = arith.constant 0 : i32
    %c0_i32_2 = arith.constant 0 : i32
    return %c0_i32, %c0_i32_0, %c0_i32_1 : i32, i32, i32
  }
  func.func @transform_7(%arg0: i32) -> (i32, i32) {
    %c0_i32 = arith.constant 0 : i32
    %c0_i32_0 = arith.constant 0 : i32
    %c0_i32_1 = arith.constant 0 : i32
    return %c0_i32, %c0_i32_0 : i32, i32
  }
  func.func @transform_8(%arg0: i32) -> (i32, i32) {
    %c0_i32 = arith.constant 0 : i32
    %c0_i32_0 = arith.constant 0 : i32
    %c0_i32_1 = arith.constant 0 : i32
    return %c0_i32, %c0_i32_0 : i32, i32
  }
  func.func @transform_9(%arg0: i32) -> (i32, i32) {
    %c0_i32 = arith.constant 0 : i32
    %c0_i32_0 = arith.constant 0 : i32
    %c0_i32_1 = arith.constant 0 : i32
    return %c0_i32, %c0_i32_0 : i32, i32
  }
  func.func @transform_10(%arg0: i32) -> (i32, i32) {
    %c0_i32 = arith.constant 0 : i32
    %c0_i32_0 = arith.constant 0 : i32
    %c0_i32_1 = arith.constant 0 : i32
    return %c0_i32, %c0_i32_0 : i32, i32
  }
  func.func @transform_11(%arg0: i32) -> (i32, i32) {
    %c0_i32 = arith.constant 0 : i32
    %c0_i32_0 = arith.constant 0 : i32
    %c0_i32_1 = arith.constant 0 : i32
    return %c0_i32, %c0_i32_0 : i32, i32
  }
  func.func @transform_12(%arg0: i32) -> (i32, i32) {
    %c0_i32 = arith.constant 0 : i32
    %c0_i32_0 = arith.constant 0 : i32
    %c0_i32_1 = arith.constant 0 : i32
    return %c0_i32, %c0_i32_0 : i32, i32
  }
  func.func @transform_13(%arg0: i32) -> (i32, i32) {
    %c0_i32 = arith.constant 0 : i32
    %c0_i32_0 = arith.constant 0 : i32
    %c0_i32_1 = arith.constant 0 : i32
    return %c0_i32, %c0_i32_0 : i32, i32
  }
  func.func @transform_14(%arg0: i32) -> (i32, i32, i32) {
    %c0_i32 = arith.constant 0 : i32
    %c0_i32_0 = arith.constant 0 : i32
    %c0_i32_1 = arith.constant 0 : i32
    return %arg0, %c0_i32, %c0_i32_0 : i32, i32, i32
  }
}

</mosaic_0001>

<llo_original>
// kernel: tpu_custom_call.1
$region0: #{tpu_custom_call.1}
  #allocation0 [shape = 'u32[]', space=smem, size = 0x4, offset = 0x4, fixed_abs, tag = 'smem constant byte address 0x4 - core index']
  #allocation1 [shape = 'u32[144,128]{1,0:T(1,128)}', space=vmem, size = 0x12000, scoped, tag = 'internal scratch']
  %s0 = inlined_call_operand.hbm [shape: f32[8,128], index: 0, kind: input, shape index: {}]
  %s1 = inlined_call_operand.hbm [shape: f32[16,128], index: 1, kind: output, shape index: {}]
  %s2 = sld [smem:[#allocation0]]
  $region41: #{tpu_custom_call.1} parent=0
    _
  %s4 = ssub.s32 1, %s2
  %s5 = scalar_select 0, %s4, %s2
  $region1: #{tpu_custom_call.1} parent=0
    #allocation2 [shape = 'u8[4096]{0}', space=vmem, size = 0x1000, scoped, tag = 'input window, operand 0, single buffered']
    #allocation3 [shape = 's32[2]{0}', space=sflag, size = 0x8, scoped, tag = 'scoped memory for tpu_custom_call.1']
    #allocation4 [shape = 's32[2]{0}', space=sflag, size = 0x8, scoped, tag = 'scoped memory for tpu_custom_call.1']
    #allocation5 [shape = 'u8[8192]{0}', space=vmem, size = 0x2000, scoped, tag = 'output window, operand 0']
    %6 = vsyncpa [#allocation3], 0
    %7 = vsyncpa [#allocation4], 0
    %s8 = scalar_lea.sflag [#allocation4], 1
    %9 = vsyncpa %s8, 0
    loop: start=0, step=1, limit=4
    $region2: #{tpu_custom_call.1} parent=1 // loop_pre_header
      _
    $region3: #{tpu_custom_call.1} parent=1 // loop_header
      %s11 = sphi 0, %s15
      %p12 = scmp.ge.s32.totalorder %s11, 4
      %s19 = sphi 0, %s19
      %s21 = sphi 0, %s19
      %s22 = sphi 0, %s21
      %s36 = sphi 0, %s22
      %s42 = sphi 0, %s44
      %s45 = sphi 0, %s42
      %s46 = sphi 0, %s45
      %s62 = sphi 0, %s46
    $region4: #{tpu_custom_call.1} parent=1 // loop_header_branch
      %14 = sbr.rel (%p12) target = $region8
    $region5: #{tpu_custom_call.1} parent=1 // loop_body
      %s16 = ssub.s32 %s11, 1
      %s17 = ssub.s32 %s11, 2
      %s18 = sadd.s32 %s11, 1
      %s20 = sadd.s32 %s19, 1
      %p23 = scmp.eq.s32.totalorder %s11, 1
      %p24 = scmp.ne.s32.totalorder %s19, %s21
      %p25 = scmp.eq.s32.totalorder %s11, 0
      %p26 = por %p24, %p25
      %p27 = scmp.ne.s32.totalorder %s19, %s21
      %p28 = scmp.eq.s32.totalorder %s16, 1
      %p29 = por %p27, %p28
      %p30 = scmp.ne.s32.totalorder %s21, %s22
      %p31 = scmp.eq.s32.totalorder %s16, 0
      %p32 = por %p30, %p31
      %p33 = scmp.ne.s32.totalorder %s21, %s22
      %p34 = scmp.eq.s32.totalorder %s17, 1
      %p35 = por %p33, %p34
      %p37 = scmp.ne.s32.totalorder %s22, %s36
      %p38 = scmp.eq.s32.totalorder %s17, 0
      %p39 = por %p37, %p38
      %s40 = ssub.s32 %s11, %s18
      %p41 = scmp.eq.s32.totalorder %s40, 0
      %s43 = sadd.s32 %s42, 1
      %s44 = scalar_select %p41, %s42, %s43
      %p47 = pneg %p41
      %p48 = scmp.eq.s32.totalorder %s11, 1
      %p49 = por %p47, %p48
      %p50 = scmp.ne.s32.totalorder %s42, %s45
      %p51 = scmp.eq.s32.totalorder %s11, 0
      %p52 = por %p50, %p51
      %p53 = scmp.ne.s32.totalorder %s42, %s45
      %p54 = scmp.eq.s32.totalorder %s16, 1
      %p55 = por %p53, %p54
      %p56 = scmp.ne.s32.totalorder %s45, %s46
      %p57 = scmp.eq.s32.totalorder %s16, 0
      %p58 = por %p56, %p57
      %p59 = scmp.ne.s32.totalorder %s45, %s46
      %p60 = scmp.eq.s32.totalorder %s17, 1
      %p61 = por %p59, %p60
      %p63 = scmp.ne.s32.totalorder %s46, %s62
      %p64 = scmp.eq.s32.totalorder %s17, 0
      %p65 = por %p63, %p64
      %p66 = scmp.le.s32.totalorder 1, %s11
      %p67 = scmp.lt.s32.totalorder %s11, 3
      %p68 = pnand %p66, %p67
      %p69 = pneg %p68
      // Predicated region
      $region9: #{tpu_custom_call.1} parent=5 // pred_check
        _
      $region10: #{tpu_custom_call.1} parent=5 // pred_check_branch
        %71 = sbr.rel (%p68) target = $region12
      $region11: #{tpu_custom_call.1} parent=5 // pred_region
        %s72 = ssub.s32 %s11, 1
        // Predicated region
        $region13: #{tpu_custom_call.1} parent=11 // pred_check
          %p73 = pneg %p32
        $region14: #{tpu_custom_call.1} parent=11 // pred_check_branch
          %75 = sbr.rel (%p73) target = $region16
        $region15: #{tpu_custom_call.1} parent=11 // pred_region
          %s77 = ssub.s32 128, 128
          %78 = vsyncadd [#allocation3], %s77
          %s80 = sshll.u32 [#allocation2], 4
          %s81 = int_to_ptr.vmem [resolvable:$true] %s80
          %83 = dma.hbm_to_vmem [thread:$0]  %s0, 128, %s81, [#allocation3]
        $region16: #{tpu_custom_call.1} parent=11 // pred_fallthru
          _
      $region12: #{tpu_custom_call.1} parent=5 // pred_fallthru
        _
      %p84 = scmp.lt.s32.totalorder %s11, 2
      // Predicated region
      $region17: #{tpu_custom_call.1} parent=5 // pred_check
        %p85 = pneg %p84
      $region18: #{tpu_custom_call.1} parent=5 // pred_check_branch
        %87 = sbr.rel (%p85) target = $region20
      $region19: #{tpu_custom_call.1} parent=5 // pred_region
        _
      $region20: #{tpu_custom_call.1} parent=5 // pred_fallthru
        _
      %p88 = scmp.le.s32.totalorder 1, %s11
      %p89 = scmp.lt.s32.totalorder %s11, 3
      %p90 = pnand %p88, %p89
      %p91 = pneg %p90
      // Predicated region
      $region21: #{tpu_custom_call.1} parent=5 // pred_check
        _
      $region22: #{tpu_custom_call.1} parent=5 // pred_check_branch
        %93 = sbr.rel (%p90) target = $region24
      $region23: #{tpu_custom_call.1} parent=5 // pred_region
        %s94 = ssub.s32 %s11, 1
        // Predicated region
        $region25: #{tpu_custom_call.1} parent=23 // pred_check
          %p95 = pneg %p32
        $region26: #{tpu_custom_call.1} parent=23 // pred_check_branch
          %97 = sbr.rel (%p95) target = $region28
        $region27: #{tpu_custom_call.1} parent=23 // pred_region
          %98 = dma.done [#allocation3], 128
        $region28: #{tpu_custom_call.1} parent=23 // pred_fallthru
          _
        %p99 = pneg %p32
        %p100 = pneg %p29
        %p101 = pneg %p58
        %p102 = pneg %p55
        %s103 = sand.u32 %s45, 1
        %s104 = scalar_lea.sflag [#allocation4], %s103
        %s105 = sand.u32 %s45, 1
        %s106 = smul.addr %s105, 8
        %s107 = scalar_lea.vmem [#allocation5], %s106
        %v108 = vld [vmem:[#allocation2] sm:$0xff]
        %109 = vst [vmem:[%s107] sm:$0xff] %v108
        %s110 = sand.u32 %s45, 1
        %s111 = scalar_lea.sflag [#allocation4], %s110
        %s112 = sand.u32 %s45, 1
        %s113 = smul.addr %s112, 8
        %s114 = scalar_lea.vmem [#allocation5], %s113
        // Predicated region
        $region29: #{tpu_custom_call.1} parent=23 // pred_check
          %p115 = pneg %p55
        $region30: #{tpu_custom_call.1} parent=23 // pred_check_branch
          %117 = sbr.rel (%p115) target = $region32
        $region31: #{tpu_custom_call.1} parent=23 // pred_region
          %s119 = ssub.s32 128, 128
          %120 = vsyncadd %s111, %s119
          %s121 = smul.addr %s16, 128
          %s122 = scalar_lea.hbm %s1, %s121
          %s124 = sshll.u32 %s114, 4
          %s125 = int_to_ptr.vmem [resolvable:$true] %s124
          %127 = dma.vmem_to_hbm [thread:$0]  %s125, 128, %s122, %s111
        $region32: #{tpu_custom_call.1} parent=23 // pred_fallthru
          _
      $region24: #{tpu_custom_call.1} parent=5 // pred_fallthru
        _
      %p128 = scmp.le.s32.totalorder 2, %s11
      // Predicated region
      $region33: #{tpu_custom_call.1} parent=5 // pred_check
        %p129 = pneg %p128
      $region34: #{tpu_custom_call.1} parent=5 // pred_check_branch
        %131 = sbr.rel (%p129) target = $region36
      $region35: #{tpu_custom_call.1} parent=5 // pred_region
        %s132 = ssub.s32 %s11, 2
        // Predicated region
        $region37: #{tpu_custom_call.1} parent=35 // pred_check
          %p133 = pneg %p61
        $region38: #{tpu_custom_call.1} parent=35 // pred_check_branch
          %135 = sbr.rel (%p133) target = $region40
        $region39: #{tpu_custom_call.1} parent=35 // pred_region
          %s136 = sand.u32 %s46, 1
          %s137 = scalar_lea.sflag [#allocation4], %s136
          %s138 = sand.u32 %s46, 1
          %s139 = smul.addr %s138, 8
          %s140 = scalar_lea.vmem [#allocation5], %s139
          %141 = dma.done %s137, 128
        $region40: #{tpu_custom_call.1} parent=35 // pred_fallthru
          _
      $region36: #{tpu_custom_call.1} parent=5 // pred_fallthru
        _
    $region6: #{tpu_custom_call.1} parent=1 // loop_footer
      %s15 = sadd.s32 1, %s11
    $region7: #{tpu_custom_call.1} parent=1 // loop_footer_branch
      %10 = sbr.rel target = $region3
    $region8: #{tpu_custom_call.1} parent=1 // loop_exit
      _
    %142 = vsyncpa [#allocation3], 1
    %s143 = scalar_lea.sflag [#allocation3], 1
    %144 = vsyncpa %s143, 1
    %145 = vsyncpa [#allocation4], 1
    %s146 = scalar_lea.sflag [#allocation4], 1
    %147 = vsyncpa %s146, 1

// kernel: tpu_custom_call.1
$region0: #{tpu_custom_call.1}
  #allocation0 [shape = 'u32[]', space=smem, size = 0x4, offset = 0x4, fixed_abs, tag = 'smem constant byte address 0x4 - core index']
  #allocation1 [shape = 'u32[144,128]{1,0:T(1,128)}', space=vmem, size = 0x12000, scoped, tag = 'internal scratch']
  %s0 = inlined_call_operand.hbm [shape: f32[2,8,128], index: 0, kind: input, shape index: {}]
  %s1 = inlined_call_operand.vmem [shape: f32[1,128], index: 1, kind: input, shape index: {}]
  %s2 = inlined_call_operand.vmem [shape: f32[1,128], index: 2, kind: input, shape index: {}]
  %s3 = inlined_call_operand.hbm [shape: f32[4,32,128], index: 3, kind: input, shape index: {}]
  %s4 = inlined_call_operand.hbm [shape: f32[4,32,128], index: 4, kind: input, shape index: {}]
  %s5 = inlined_call_operand.hbm [shape: f32[4,32,128], index: 5, kind: input, shape index: {}]
  %s6 = inlined_call_operand.hbm [shape: f32[4,32,128], index: 6, kind: input, shape index: {}]
  %s7 = inlined_call_operand.vmem [shape: f32[1,128], index: 7, kind: input, shape index: {}]
  %s8 = inlined_call_operand.vmem [shape: f32[1,128], index: 8, kind: input, shape index: {}]
  %s9 = inlined_call_operand.vmem [shape: f32[1,128], index: 9, kind: input, shape index: {}]
  %s10 = inlined_call_operand.hbm [shape: f32[128,512], index: 10, kind: input, shape index: {}]
  %s11 = inlined_call_operand.vmem [shape: f32[1,512], index: 11, kind: input, shape index: {}]
  %s12 = inlined_call_operand.hbm [shape: f32[512,128], index: 12, kind: input, shape index: {}]
  %s13 = inlined_call_operand.vmem [shape: f32[1,128], index: 13, kind: input, shape index: {}]
  %s14 = inlined_call_operand.hbm [shape: f32[2,8,128], index: 14, kind: output, shape index: {}]
  %s15 = sld [smem:[#allocation0]]
  $region124: #{tpu_custom_call.1} parent=0
    _
  %s17 = ssub.s32 1, %s15
  %s18 = scalar_select 0, %s17, %s15
  $region1: #{tpu_custom_call.1} parent=0
    #allocation2 [shape = 'u8[8192]{0}', space=vmem, size = 0x2000, scoped, tag = 'input window, operand 0']
    #allocation3 [shape = 's32[2]{0}', space=sflag, size = 0x8, scoped, tag = 'scoped memory for tpu_custom_call.1']
    #allocation4 [shape = 's32[2]{0}', space=sflag, size = 0x8, scoped, tag = 'scoped memory for tpu_custom_call.1']
    #allocation5 [shape = 'u8[65536]{0}', space=vmem, size = 0x10000, scoped, tag = 'input window, operand 3, single buffered']
    #allocation6 [shape = 's32[1]{0}', space=sflag, size = 0x4, scoped, tag = 'scoped memory for tpu_custom_call.1']
    #allocation7 [shape = 'u8[65536]{0}', space=vmem, size = 0x10000, scoped, tag = 'input window, operand 4, single buffered']
    #allocation8 [shape = 'u8[65536]{0}', space=vmem, size = 0x10000, scoped, tag = 'input window, operand 5, single buffered']
    #allocation9 [shape = 's32[1]{0}', space=sflag, size = 0x4, scoped, tag = 'scoped memory for tpu_custom_call.1']
    #allocation10 [shape = 'u8[65536]{0}', space=vmem, size = 0x10000, scoped, tag = 'input window, operand 6, single buffered']
    #allocation11 [shape = 'u8[262144]{0}', space=vmem, size = 0x40000, scoped, tag = 'input window, operand 10, single buffered']
    #allocation12 [shape = 's32[1]{0}', space=sflag, size = 0x4, scoped, tag = 'scoped memory for tpu_custom_call.1']
    #allocation13 [shape = 'u8[262144]{0}', space=vmem, size = 0x40000, scoped, tag = 'input window, operand 12, single buffered']
    #allocation14 [shape = 'u8[8192]{0}', space=vmem, size = 0x2000, scoped, tag = 'output window, operand 0']
    %19 = vsyncpa [#allocation3], 0
    %s20 = scalar_lea.sflag [#allocation3], 1
    %21 = vsyncpa %s20, 0
    %22 = vsyncpa [#allocation6], 0
    %23 = vsyncpa [#allocation9], 0
    %24 = vsyncpa [#allocation12], 0
    %25 = vsyncpa [#allocation4], 0
    %s26 = scalar_lea.sflag [#allocation4], 1
    %27 = vsyncpa %s26, 0
    loop: start=0, step=1, limit=4
    $region2: #{tpu_custom_call.1} parent=1 // loop_pre_header
      _
    $region3: #{tpu_custom_call.1} parent=1 // loop_header
      %s29 = sphi 0, %s33
      %p30 = scmp.ge.s32.totalorder %s29, 4
      %s39 = sphi 0, %s41
      %s42 = sphi 0, %s39
      %s43 = sphi 0, %s42
      %s59 = sphi 0, %s43
      %s63 = sphi 0, %s63
      %s65 = sphi 0, %s63
      %s66 = sphi 0, %s65
      %s80 = sphi 0, %s66
      %s84 = sphi 0, %s84
      %s86 = sphi 0, %s84
      %s87 = sphi 0, %s86
      %s101 = sphi 0, %s87
      %s105 = sphi 0, %s105
      %s107 = sphi 0, %s105
      %s108 = sphi 0, %s107
      %s122 = sphi 0, %s108
      %s126 = sphi 0, %s126
      %s128 = sphi 0, %s126
      %s129 = sphi 0, %s128
      %s143 = sphi 0, %s129
      %s147 = sphi 0, %s147
      %s149 = sphi 0, %s147
      %s150 = sphi 0, %s149
      %s164 = sphi 0, %s150
      %s168 = sphi 0, %s168
      %s170 = sphi 0, %s168
      %s171 = sphi 0, %s170
      %s185 = sphi 0, %s171
      %s189 = sphi 0, %s189
      %s191 = sphi 0, %s189
      %s192 = sphi 0, %s191
      %s206 = sphi 0, %s192
      %s210 = sphi 0, %s210
      %s212 = sphi 0, %s210
      %s213 = sphi 0, %s212
      %s227 = sphi 0, %s213
      %s231 = sphi 0, %s231
      %s233 = sphi 0, %s231
      %s234 = sphi 0, %s233
      %s248 = sphi 0, %s234
      %s252 = sphi 0, %s252
      %s254 = sphi 0, %s252
      %s255 = sphi 0, %s254
      %s269 = sphi 0, %s255
      %s273 = sphi 0, %s273
      %s275 = sphi 0, %s273
      %s276 = sphi 0, %s275
      %s290 = sphi 0, %s276
      %s294 = sphi 0, %s294
      %s296 = sphi 0, %s294
      %s297 = sphi 0, %s296
      %s311 = sphi 0, %s297
      %s315 = sphi 0, %s315
      %s317 = sphi 0, %s315
      %s318 = sphi 0, %s317
      %s332 = sphi 0, %s318
      %s338 = sphi 0, %s340
      %s341 = sphi 0, %s338
      %s342 = sphi 0, %s341
      %s358 = sphi 0, %s342
    $region4: #{tpu_custom_call.1} parent=1 // loop_header_branch
      %32 = sbr.rel (%p30) target = $region8
    $region5: #{tpu_custom_call.1} parent=1 // loop_body
      %s34 = ssub.s32 %s29, 1
      %s35 = ssub.s32 %s29, 2
      %s36 = sadd.s32 %s29, 1
      %s37 = ssub.s32 %s29, %s36
      %p38 = scmp.eq.s32.totalorder %s37, 0
      %s40 = sadd.s32 %s39, 1
      %s41 = scalar_select %p38, %s39, %s40
      %p44 = pneg %p38
      %p45 = scmp.eq.s32.totalorder %s29, 1
      %p46 = por %p44, %p45
      %p47 = scmp.ne.s32.totalorder %s39, %s42
      %p48 = scmp.eq.s32.totalorder %s29, 0
      %p49 = por %p47, %p48
      %p50 = scmp.ne.s32.totalorder %s39, %s42
      %p51 = scmp.eq.s32.totalorder %s34, 1
      %p52 = por %p50, %p51
      %p53 = scmp.ne.s32.totalorder %s42, %s43
      %p54 = scmp.eq.s32.totalorder %s34, 0
      %p55 = por %p53, %p54
      %p56 = scmp.ne.s32.totalorder %s42, %s43
      %p57 = scmp.eq.s32.totalorder %s35, 1
      %p58 = por %p56, %p57
      %p60 = scmp.ne.s32.totalorder %s43, %s59
      %p61 = scmp.eq.s32.totalorder %s35, 0
      %p62 = por %p60, %p61
      %s64 = sadd.s32 %s63, 1
      %p67 = scmp.eq.s32.totalorder %s29, 1
      %p68 = scmp.ne.s32.totalorder %s63, %s65
      %p69 = scmp.eq.s32.totalorder %s29, 0
      %p70 = por %p68, %p69
      %p71 = scmp.ne.s32.totalorder %s63, %s65
      %p72 = scmp.eq.s32.totalorder %s34, 1
      %p73 = por %p71, %p72
      %p74 = scmp.ne.s32.totalorder %s65, %s66
      %p75 = scmp.eq.s32.totalorder %s34, 0
      %p76 = por %p74, %p75
      %p77 = scmp.ne.s32.totalorder %s65, %s66
      %p78 = scmp.eq.s32.totalorder %s35, 1
      %p79 = por %p77, %p78
      %p81 = scmp.ne.s32.totalorder %s66, %s80
      %p82 = scmp.eq.s32.totalorder %s35, 0
      %p83 = por %p81, %p82
      %s85 = sadd.s32 %s84, 1
      %p88 = scmp.eq.s32.totalorder %s29, 1
      %p89 = scmp.ne.s32.totalorder %s84, %s86
      %p90 = scmp.eq.s32.totalorder %s29, 0
      %p91 = por %p89, %p90
      %p92 = scmp.ne.s32.totalorder %s84, %s86
      %p93 = scmp.eq.s32.totalorder %s34, 1
      %p94 = por %p92, %p93
      %p95 = scmp.ne.s32.totalorder %s86, %s87
      %p96 = scmp.eq.s32.totalorder %s34, 0
      %p97 = por %p95, %p96
      %p98 = scmp.ne.s32.totalorder %s86, %s87
      %p99 = scmp.eq.s32.totalorder %s35, 1
      %p100 = por %p98, %p99
      %p102 = scmp.ne.s32.totalorder %s87, %s101
      %p103 = scmp.eq.s32.totalorder %s35, 0
      %p104 = por %p102, %p103
      %s106 = sadd.s32 %s105, 1
      %p109 = scmp.eq.s32.totalorder %s29, 1
      %p110 = scmp.ne.s32.totalorder %s105, %s107
      %p111 = scmp.eq.s32.totalorder %s29, 0
      %p112 = por %p110, %p111
      %p113 = scmp.ne.s32.totalorder %s105, %s107
      %p114 = scmp.eq.s32.totalorder %s34, 1
      %p115 = por %p113, %p114
      %p116 = scmp.ne.s32.totalorder %s107, %s108
      %p117 = scmp.eq.s32.totalorder %s34, 0
      %p118 = por %p116, %p117
      %p119 = scmp.ne.s32.totalorder %s107, %s108
      %p120 = scmp.eq.s32.totalorder %s35, 1
      %p121 = por %p119, %p120
      %p123 = scmp.ne.s32.totalorder %s108, %s122
      %p124 = scmp.eq.s32.totalorder %s35, 0
      %p125 = por %p123, %p124
      %s127 = sadd.s32 %s126, 1
      %p130 = scmp.eq.s32.totalorder %s29, 1
      %p131 = scmp.ne.s32.totalorder %s126, %s128
      %p132 = scmp.eq.s32.totalorder %s29, 0
      %p133 = por %p131, %p132
      %p134 = scmp.ne.s32.totalorder %s126, %s128
      %p135 = scmp.eq.s32.totalorder %s34, 1
      %p136 = por %p134, %p135
      %p137 = scmp.ne.s32.totalorder %s128, %s129
      %p138 = scmp.eq.s32.totalorder %s34, 0
      %p139 = por %p137, %p138
      %p140 = scmp.ne.s32.totalorder %s128, %s129
      %p141 = scmp.eq.s32.totalorder %s35, 1
      %p142 = por %p140, %p141
      %p144 = scmp.ne.s32.totalorder %s129, %s143
      %p145 = scmp.eq.s32.totalorder %s35, 0
      %p146 = por %p144, %p145
      %s148 = sadd.s32 %s147, 1
      %p151 = scmp.eq.s32.totalorder %s29, 1
      %p152 = scmp.ne.s32.totalorder %s147, %s149
      %p153 = scmp.eq.s32.totalorder %s29, 0
      %p154 = por %p152, %p153
      %p155 = scmp.ne.s32.totalorder %s147, %s149
      %p156 = scmp.eq.s32.totalorder %s34, 1
      %p157 = por %p155, %p156
      %p158 = scmp.ne.s32.totalorder %s149, %s150
      %p159 = scmp.eq.s32.totalorder %s34, 0
      %p160 = por %p158, %p159
      %p161 = scmp.ne.s32.totalorder %s149, %s150
      %p162 = scmp.eq.s32.totalorder %s35, 1
      %p163 = por %p161, %p162
      %p165 = scmp.ne.s32.totalorder %s150, %s164
      %p166 = scmp.eq.s32.totalorder %s35, 0
      %p167 = por %p165, %p166
      %s169 = sadd.s32 %s168, 1
      %p172 = scmp.eq.s32.totalorder %s29, 1
      %p173 = scmp.ne.s32.totalorder %s168, %s170
      %p174 = scmp.eq.s32.totalorder %s29, 0
      %p175 = por %p173, %p174
      %p176 = scmp.ne.s32.totalorder %s168, %s170
      %p177 = scmp.eq.s32.totalorder %s34, 1
      %p178 = por %p176, %p177
      %p179 = scmp.ne.s32.totalorder %s170, %s171
      %p180 = scmp.eq.s32.totalorder %s34, 0
      %p181 = por %p179, %p180
      %p182 = scmp.ne.s32.totalorder %s170, %s171
      %p183 = scmp.eq.s32.totalorder %s35, 1
      %p184 = por %p182, %p183
      %p186 = scmp.ne.s32.totalorder %s171, %s185
      %p187 = scmp.eq.s32.totalorder %s35, 0
      %p188 = por %p186, %p187
      %s190 = sadd.s32 %s189, 1
      %p193 = scmp.eq.s32.totalorder %s29, 1
      %p194 = scmp.ne.s32.totalorder %s189, %s191
      %p195 = scmp.eq.s32.totalorder %s29, 0
      %p196 = por %p194, %p195
      %p197 = scmp.ne.s32.totalorder %s189, %s191
      %p198 = scmp.eq.s32.totalorder %s34, 1
      %p199 = por %p197, %p198
      %p200 = scmp.ne.s32.totalorder %s191, %s192
      %p201 = scmp.eq.s32.totalorder %s34, 0
      %p202 = por %p200, %p201
      %p203 = scmp.ne.s32.totalorder %s191, %s192
      %p204 = scmp.eq.s32.totalorder %s35, 1
      %p205 = por %p203, %p204
      %p207 = scmp.ne.s32.totalorder %s192, %s206
      %p208 = scmp.eq.s32.totalorder %s35, 0
      %p209 = por %p207, %p208
      %s211 = sadd.s32 %s210, 1
      %p214 = scmp.eq.s32.totalorder %s29, 1
      %p215 = scmp.ne.s32.totalorder %s210, %s212
      %p216 = scmp.eq.s32.totalorder %s29, 0
      %p217 = por %p215, %p216
      %p218 = scmp.ne.s32.totalorder %s210, %s212
      %p219 = scmp.eq.s32.totalorder %s34, 1
      %p220 = por %p218, %p219
      %p221 = scmp.ne.s32.totalorder %s212, %s213
      %p222 = scmp.eq.s32.totalorder %s34, 0
      %p223 = por %p221, %p222
      %p224 = scmp.ne.s32.totalorder %s212, %s213
      %p225 = scmp.eq.s32.totalorder %s35, 1
      %p226 = por %p224, %p225
      %p228 = scmp.ne.s32.totalorder %s213, %s227
      %p229 = scmp.eq.s32.totalorder %s35, 0
      %p230 = por %p228, %p229
      %s232 = sadd.s32 %s231, 1
      %p235 = scmp.eq.s32.totalorder %s29, 1
      %p236 = scmp.ne.s32.totalorder %s231, %s233
      %p237 = scmp.eq.s32.totalorder %s29, 0
      %p238 = por %p236, %p237
      %p239 = scmp.ne.s32.totalorder %s231, %s233
      %p240 = scmp.eq.s32.totalorder %s34, 1
      %p241 = por %p239, %p240
      %p242 = scmp.ne.s32.totalorder %s233, %s234
      %p243 = scmp.eq.s32.totalorder %s34, 0
      %p244 = por %p242, %p243
      %p245 = scmp.ne.s32.totalorder %s233, %s234
      %p246 = scmp.eq.s32.totalorder %s35, 1
      %p247 = por %p245, %p246
      %p249 = scmp.ne.s32.totalorder %s234, %s248
      %p250 = scmp.eq.s32.totalorder %s35, 0
      %p251 = por %p249, %p250
      %s253 = sadd.s32 %s252, 1
      %p256 = scmp.eq.s32.totalorder %s29, 1
      %p257 = scmp.ne.s32.totalorder %s252, %s254
      %p258 = scmp.eq.s32.totalorder %s29, 0
      %p259 = por %p257, %p258
      %p260 = scmp.ne.s32.totalorder %s252, %s254
      %p261 = scmp.eq.s32.totalorder %s34, 1
      %p262 = por %p260, %p261
      %p263 = scmp.ne.s32.totalorder %s254, %s255
      %p264 = scmp.eq.s32.totalorder %s34, 0
      %p265 = por %p263, %p264
      %p266 = scmp.ne.s32.totalorder %s254, %s255
      %p267 = scmp.eq.s32.totalorder %s35, 1
      %p268 = por %p266, %p267
      %p270 = scmp.ne.s32.totalorder %s255, %s269
      %p271 = scmp.eq.s32.totalorder %s35, 0
      %p272 = por %p270, %p271
      %s274 = sadd.s32 %s273, 1
      %p277 = scmp.eq.s32.totalorder %s29, 1
      %p278 = scmp.ne.s32.totalorder %s273, %s275
      %p279 = scmp.eq.s32.totalorder %s29, 0
      %p280 = por %p278, %p279
      %p281 = scmp.ne.s32.totalorder %s273, %s275
      %p282 = scmp.eq.s32.totalorder %s34, 1
      %p283 = por %p281, %p282
      %p284 = scmp.ne.s32.totalorder %s275, %s276
      %p285 = scmp.eq.s32.totalorder %s34, 0
      %p286 = por %p284, %p285
      %p287 = scmp.ne.s32.totalorder %s275, %s276
      %p288 = scmp.eq.s32.totalorder %s35, 1
      %p289 = por %p287, %p288
      %p291 = scmp.ne.s32.totalorder %s276, %s290
      %p292 = scmp.eq.s32.totalorder %s35, 0
      %p293 = por %p291, %p292
      %s295 = sadd.s32 %s294, 1
      %p298 = scmp.eq.s32.totalorder %s29, 1
      %p299 = scmp.ne.s32.totalorder %s294, %s296
      %p300 = scmp.eq.s32.totalorder %s29, 0
      %p301 = por %p299, %p300
      %p302 = scmp.ne.s32.totalorder %s294, %s296
      %p303 = scmp.eq.s32.totalorder %s34, 1
      %p304 = por %p302, %p303
      %p305 = scmp.ne.s32.totalorder %s296, %s297
      %p306 = scmp.eq.s32.totalorder %s34, 0
      %p307 = por %p305, %p306
      %p308 = scmp.ne.s32.totalorder %s296, %s297
      %p309 = scmp.eq.s32.totalorder %s35, 1
      %p310 = por %p308, %p309
      %p312 = scmp.ne.s32.totalorder %s297, %s311
      %p313 = scmp.eq.s32.totalorder %s35, 0
      %p314 = por %p312, %p313
      %s316 = sadd.s32 %s315, 1
      %p319 = scmp.eq.s32.totalorder %s29, 1
      %p320 = scmp.ne.s32.totalorder %s315, %s317
      %p321 = scmp.eq.s32.totalorder %s29, 0
      %p322 = por %p320, %p321
      %p323 = scmp.ne.s32.totalorder %s315, %s317
      %p324 = scmp.eq.s32.totalorder %s34, 1
      %p325 = por %p323, %p324
      %p326 = scmp.ne.s32.totalorder %s317, %s318
      %p327 = scmp.eq.s32.totalorder %s34, 0
      %p328 = por %p326, %p327
      %p329 = scmp.ne.s32.totalorder %s317, %s318
      %p330 = scmp.eq.s32.totalorder %s35, 1
      %p331 = por %p329, %p330
      %p333 = scmp.ne.s32.totalorder %s318, %s332
      %p334 = scmp.eq.s32.totalorder %s35, 0
      %p335 = por %p333, %p334
      %s336 = ssub.s32 %s29, %s36
      %p337 = scmp.eq.s32.totalorder %s336, 0
      %s339 = sadd.s32 %s338, 1
      %s340 = scalar_select %p337, %s338, %s339
      %p343 = pneg %p337
      %p344 = scmp.eq.s32.totalorder %s29, 1
      %p345 = por %p343, %p344
      %p346 = scmp.ne.s32.totalorder %s338, %s341
      %p347 = scmp.eq.s32.totalorder %s29, 0
      %p348 = por %p346, %p347
      %p349 = scmp.ne.s32.totalorder %s338, %s341
      %p350 = scmp.eq.s32.totalorder %s34, 1
      %p351 = por %p349, %p350
      %p352 = scmp.ne.s32.totalorder %s341, %s342
      %p353 = scmp.eq.s32.totalorder %s34, 0
      %p354 = por %p352, %p353
      %p355 = scmp.ne.s32.totalorder %s341, %s342
      %p356 = scmp.eq.s32.totalorder %s35, 1
      %p357 = por %p355, %p356
      %p359 = scmp.ne.s32.totalorder %s342, %s358
      %p360 = scmp.eq.s32.totalorder %s35, 0
      %p361 = por %p359, %p360
      %p362 = scmp.le.s32.totalorder 1, %s29
      %p363 = scmp.lt.s32.totalorder %s29, 3
      %p364 = pnand %p362, %p363
      %p365 = pneg %p364
      // Predicated region
      $region9: #{tpu_custom_call.1} parent=5 // pred_check
        _
      $region10: #{tpu_custom_call.1} parent=5 // pred_check_branch
        %367 = sbr.rel (%p364) target = $region12
      $region11: #{tpu_custom_call.1} parent=5 // pred_region
        %s368 = ssub.s32 %s29, 1
        // Predicated region
        $region13: #{tpu_custom_call.1} parent=11 // pred_check
          %p369 = pneg %p76
        $region14: #{tpu_custom_call.1} parent=11 // pred_check_branch
          %371 = sbr.rel (%p369) target = $region16
        $region15: #{tpu_custom_call.1} parent=11 // pred_region
          _
        $region16: #{tpu_custom_call.1} parent=11 // pred_fallthru
          _
        // Predicated region
        $region17: #{tpu_custom_call.1} parent=11 // pred_check
          %p372 = pneg %p97
        $region18: #{tpu_custom_call.1} parent=11 // pred_check_branch
          %374 = sbr.rel (%p372) target = $region20
        $region19: #{tpu_custom_call.1} parent=11 // pred_region
          _
        $region20: #{tpu_custom_call.1} parent=11 // pred_fallthru
          _
        // Predicated region
        $region21: #{tpu_custom_call.1} parent=11 // pred_check
          %p375 = pneg %p118
        $region22: #{tpu_custom_call.1} parent=11 // pred_check_branch
          %377 = sbr.rel (%p375) target = $region24
        $region23: #{tpu_custom_call.1} parent=11 // pred_region
          %s379 = ssub.s32 2048, 2048
          %380 = vsyncadd [#allocation6], %s379
          %s381 = sshll.u32 [#allocation5], 4
          %s382 = int_to_ptr.vmem [resolvable:$true] %s381
          %387 = dma.hbm_to_vmem [thread:$0]  %s3, 2048, %s382, [#allocation6], 128, 128, 8
        $region24: #{tpu_custom_call.1} parent=11 // pred_fallthru
          _
        // Predicated region
        $region25: #{tpu_custom_call.1} parent=11 // pred_check
          %p388 = pneg %p139
        $region26: #{tpu_custom_call.1} parent=11 // pred_check_branch
          %390 = sbr.rel (%p388) target = $region28
        $region27: #{tpu_custom_call.1} parent=11 // pred_region
          %s392 = ssub.s32 2048, 2048
          %393 = vsyncadd [#allocation6], %s392
          %s394 = sshll.u32 [#allocation7], 4
          %s395 = int_to_ptr.vmem [resolvable:$true] %s394
          %400 = dma.hbm_to_vmem [thread:$0]  %s4, 2048, %s395, [#allocation6], 128, 128, 8
        $region28: #{tpu_custom_call.1} parent=11 // pred_fallthru
          _
        // Predicated region
        $region29: #{tpu_custom_call.1} parent=11 // pred_check
          %p401 = pneg %p160
        $region30: #{tpu_custom_call.1} parent=11 // pred_check_branch
          %403 = sbr.rel (%p401) target = $region32
        $region31: #{tpu_custom_call.1} parent=11 // pred_region
          %s405 = ssub.s32 2048, 2048
          %406 = vsyncadd [#allocation9], %s405
          %s407 = sshll.u32 [#allocation8], 4
          %s408 = int_to_ptr.vmem [resolvable:$true] %s407
          %413 = dma.hbm_to_vmem [thread:$0]  %s5, 2048, %s408, [#allocation9], 128, 128, 8
        $region32: #{tpu_custom_call.1} parent=11 // pred_fallthru
          _
        // Predicated region
        $region33: #{tpu_custom_call.1} parent=11 // pred_check
          %p414 = pneg %p181
        $region34: #{tpu_custom_call.1} parent=11 // pred_check_branch
          %416 = sbr.rel (%p414) target = $region36
        $region35: #{tpu_custom_call.1} parent=11 // pred_region
          %s418 = ssub.s32 2048, 2048
          %419 = vsyncadd [#allocation9], %s418
          %s420 = sshll.u32 [#allocation10], 4
          %s421 = int_to_ptr.vmem [resolvable:$true] %s420
          %426 = dma.hbm_to_vmem [thread:$0]  %s6, 2048, %s421, [#allocation9], 128, 128, 8
        $region36: #{tpu_custom_call.1} parent=11 // pred_fallthru
          _
        // Predicated region
        $region37: #{tpu_custom_call.1} parent=11 // pred_check
          %p427 = pneg %p202
        $region38: #{tpu_custom_call.1} parent=11 // pred_check_branch
          %429 = sbr.rel (%p427) target = $region40
        $region39: #{tpu_custom_call.1} parent=11 // pred_region
          _
        $region40: #{tpu_custom_call.1} parent=11 // pred_fallthru
          _
        // Predicated region
        $region41: #{tpu_custom_call.1} parent=11 // pred_check
          %p430 = pneg %p223
        $region42: #{tpu_custom_call.1} parent=11 // pred_check_branch
          %432 = sbr.rel (%p430) target = $region44
        $region43: #{tpu_custom_call.1} parent=11 // pred_region
          _
        $region44: #{tpu_custom_call.1} parent=11 // pred_fallthru
          _
        // Predicated region
        $region45: #{tpu_custom_call.1} parent=11 // pred_check
          %p433 = pneg %p244
        $region46: #{tpu_custom_call.1} parent=11 // pred_check_branch
          %435 = sbr.rel (%p433) target = $region48
        $region47: #{tpu_custom_call.1} parent=11 // pred_region
          _
        $region48: #{tpu_custom_call.1} parent=11 // pred_fallthru
          _
        // Predicated region
        $region49: #{tpu_custom_call.1} parent=11 // pred_check
          %p436 = pneg %p265
        $region50: #{tpu_custom_call.1} parent=11 // pred_check_branch
          %438 = sbr.rel (%p436) target = $region52
        $region51: #{tpu_custom_call.1} parent=11 // pred_region
          %s440 = ssub.s32 8192, 8192
          %441 = vsyncadd [#allocation12], %s440
          %s442 = sshll.u32 [#allocation11], 4
          %s443 = int_to_ptr.vmem [resolvable:$true] %s442
          %448 = dma.hbm_to_vmem [thread:$0]  %s10, 8192, %s443, [#allocation12], 512, 512, 32
        $region52: #{tpu_custom_call.1} parent=11 // pred_fallthru
          _
        // Predicated region
        $region53: #{tpu_custom_call.1} parent=11 // pred_check
          %p449 = pneg %p286
        $region54: #{tpu_custom_call.1} parent=11 // pred_check_branch
          %451 = sbr.rel (%p449) target = $region56
        $region55: #{tpu_custom_call.1} parent=11 // pred_region
          _
        $region56: #{tpu_custom_call.1} parent=11 // pred_fallthru
          _
        // Predicated region
        $region57: #{tpu_custom_call.1} parent=11 // pred_check
          %p452 = pneg %p307
        $region58: #{tpu_custom_call.1} parent=11 // pred_check_branch
          %454 = sbr.rel (%p452) target = $region60
        $region59: #{tpu_custom_call.1} parent=11 // pred_region
          %s456 = ssub.s32 8192, 8192
          %457 = vsyncadd [#allocation12], %s456
          %s458 = sshll.u32 [#allocation13], 4
          %s459 = int_to_ptr.vmem [resolvable:$true] %s458
          %464 = dma.hbm_to_vmem [thread:$0]  %s12, 8192, %s459, [#allocation12], 128, 128, 8
        $region60: #{tpu_custom_call.1} parent=11 // pred_fallthru
          _
        // Predicated region
        $region61: #{tpu_custom_call.1} parent=11 // pred_check
          %p465 = pneg %p328
        $region62: #{tpu_custom_call.1} parent=11 // pred_check_branch
          %467 = sbr.rel (%p465) target = $region64
        $region63: #{tpu_custom_call.1} parent=11 // pred_region
          _
        $region64: #{tpu_custom_call.1} parent=11 // pred_fallthru
          _
      $region12: #{tpu_custom_call.1} parent=5 // pred_fallthru
        _
      %p468 = scmp.lt.s32.totalorder %s29, 2
      // Predicated region
      $region65: #{tpu_custom_call.1} parent=5 // pred_check
        %p469 = pneg %p468
      $region66: #{tpu_custom_call.1} parent=5 // pred_check_branch
        %471 = sbr.rel (%p469) target = $region68
      $region67: #{tpu_custom_call.1} parent=5 // pred_region
        // Predicated region
        $region69: #{tpu_custom_call.1} parent=67 // pred_check
          %p472 = pneg %p49
        $region70: #{tpu_custom_call.1} parent=67 // pred_check_branch
          %474 = sbr.rel (%p472) target = $region72
        $region71: #{tpu_custom_call.1} parent=67 // pred_region
          %s475 = sand.u32 %s39, 1
          %s476 = scalar_lea.sflag [#allocation3], %s475
          %s477 = sand.u32 %s39, 1
          %s478 = smul.addr %s477, 8
          %s479 = scalar_lea.vmem [#allocation2], %s478
          %s481 = ssub.s32 128, 128
          %482 = vsyncadd %s476, %s481
          %s483 = smul.addr %s29, 128
          %s484 = scalar_lea.hbm %s0, %s483
          %s486 = sshll.u32 %s479, 4
          %s487 = int_to_ptr.vmem [resolvable:$true] %s486
          %489 = dma.hbm_to_vmem [thread:$0]  %s484, 128, %s487, %s476
        $region72: #{tpu_custom_call.1} parent=67 // pred_fallthru
          _
      $region68: #{tpu_custom_call.1} parent=5 // pred_fallthru
        _
      %p490 = scmp.le.s32.totalorder 1, %s29
      %p491 = scmp.lt.s32.totalorder %s29, 3
      %p492 = pnand %p490, %p491
      %p493 = pneg %p492
      // Predicated region
      $region73: #{tpu_custom_call.1} parent=5 // pred_check
        _
      $region74: #{tpu_custom_call.1} parent=5 // pred_check_branch
        %495 = sbr.rel (%p492) target = $region76
      $region75: #{tpu_custom_call.1} parent=5 // pred_region
        %s496 = ssub.s32 %s29, 1
        %s497 = sand.u32 %s42, 1
        %s498 = scalar_lea.sflag [#allocation3], %s497
        %s499 = sand.u32 %s42, 1
        %s500 = smul.addr %s499, 8
        %s501 = scalar_lea.vmem [#allocation2], %s500
        // Predicated region
        $region77: #{tpu_custom_call.1} parent=75 // pred_check
          %p502 = pneg %p55
        $region78: #{tpu_custom_call.1} parent=75 // pred_check_branch
          %504 = sbr.rel (%p502) target = $region80
        $region79: #{tpu_custom_call.1} parent=75 // pred_region
          %505 = dma.done %s498, 128
        $region80: #{tpu_custom_call.1} parent=75 // pred_fallthru
          _
        // Predicated region
        $region81: #{tpu_custom_call.1} parent=75 // pred_check
          %p506 = pneg %p118
        $region82: #{tpu_custom_call.1} parent=75 // pred_check_branch
          %508 = sbr.rel (%p506) target = $region84
        $region83: #{tpu_custom_call.1} parent=75 // pred_region
          %509 = dma.done [#allocation6], 2048
        $region84: #{tpu_custom_call.1} parent=75 // pred_fallthru
          _
        // Predicated region
        $region85: #{tpu_custom_call.1} parent=75 // pred_check
          %p510 = pneg %p139
        $region86: #{tpu_custom_call.1} parent=75 // pred_check_branch
          %512 = sbr.rel (%p510) target = $region88
        $region87: #{tpu_custom_call.1} parent=75 // pred_region
          %513 = dma.done [#allocation6], 2048
        $region88: #{tpu_custom_call.1} parent=75 // pred_fallthru
          _
        // Predicated region
        $region89: #{tpu_custom_call.1} parent=75 // pred_check
          %p514 = pneg %p160
        $region90: #{tpu_custom_call.1} parent=75 // pred_check_branch
          %516 = sbr.rel (%p514) target = $region92
        $region91: #{tpu_custom_call.1} parent=75 // pred_region
          %517 = dma.done [#allocation9], 2048
        $region92: #{tpu_custom_call.1} parent=75 // pred_fallthru
          _
        // Predicated region
        $region93: #{tpu_custom_call.1} parent=75 // pred_check
          %p518 = pneg %p181
        $region94: #{tpu_custom_call.1} parent=75 // pred_check_branch
          %520 = sbr.rel (%p518) target = $region96
        $region95: #{tpu_custom_call.1} parent=75 // pred_region
          %521 = dma.done [#allocation9], 2048
        $region96: #{tpu_custom_call.1} parent=75 // pred_fallthru
          _
        // Predicated region
        $region97: #{tpu_custom_call.1} parent=75 // pred_check
          %p522 = pneg %p265
        $region98: #{tpu_custom_call.1} parent=75 // pred_check_branch
          %524 = sbr.rel (%p522) target = $region100
        $region99: #{tpu_custom_call.1} parent=75 // pred_region
          %525 = dma.done [#allocation12], 8192
        $region100: #{tpu_custom_call.1} parent=75 // pred_fallthru
          _
        // Predicated region
        $region101: #{tpu_custom_call.1} parent=75 // pred_check
          %p526 = pneg %p307
        $region102: #{tpu_custom_call.1} parent=75 // pred_check_branch
          %528 = sbr.rel (%p526) target = $region104
        $region103: #{tpu_custom_call.1} parent=75 // pred_region
          %529 = dma.done [#allocation12], 8192
        $region104: #{tpu_custom_call.1} parent=75 // pred_fallthru
          _
        %s530 = sand.u32 %s42, 1
        %s531 = scalar_lea.sflag [#allocation3], %s530
        %s532 = sand.u32 %s42, 1
        %s533 = smul.addr %s532, 8
        %s534 = scalar_lea.vmem [#allocation2], %s533
        %p535 = pneg %p55
        %p536 = pneg %p52
        %p537 = pneg %p76
        %p538 = pneg %p73
        %p539 = pneg %p97
        %p540 = pneg %p94
        %p541 = pneg %p118
        %p542 = pneg %p115
        %p543 = pneg %p139
        %p544 = pneg %p136
        %p545 = pneg %p160
        %p546 = pneg %p157
        %p547 = pneg %p181
        %p548 = pneg %p178
        %p549 = pneg %p202
        %p550 = pneg %p199
        %p551 = pneg %p223
        %p552 = pneg %p220
        %p553 = pneg %p244
        %p554 = pneg %p241
        %p555 = pneg %p265
        %p556 = pneg %p262
        %p557 = pneg %p286
        %p558 = pneg %p283
        %p559 = pneg %p307
        %p560 = pneg %p304
        %p561 = pneg %p328
        %p562 = pneg %p325
        %p563 = pneg %p354
        %p564 = pneg %p351
        %s565 = sand.u32 %s341, 1
        %s566 = scalar_lea.sflag [#allocation4], %s565
        %s567 = sand.u32 %s341, 1
        %s568 = smul.addr %s567, 8
        %s569 = scalar_lea.vmem [#allocation14], %s568
        %v570 = vld [vmem:[%s501] sm:$0xff]
        %v571 = vld [vmem:[%s1] sm:$0x1]
        %v572 = vld [vmem:[%s2] sm:$0x1]
        %573 = vadd.xlane.f32.xlu0 %v570
        %v574 = vpop.xlane.xlu0 %573
        %v575 = vrcp.pop 128.0
        %v576 = vmul.f32 %v574, %v575
        %v577 = vsub.f32 %v570, %v576
        %v578 = vmul.f32 %v577, %v577
        %579 = vadd.xlane.f32.xlu0 %v578
        %v580 = vpop.xlane.xlu0 %579
        %v581 = vmul.f32 %v580, %v575
        %v582 = vadd.f32 %v581, 1e-05
        %v583 = vrsqrt.pop %v582
        %v584 = vmul.f32 %v577, %v583
        %v586 = vlaneseq
        %v587 = vshrl.u32 %v586, 7
        %v588 = vsub.s32 0, %v587
        %v589 = vrot.slane %v571, %v588
        %v591 = vmul.f32 %v589, %v584
        %v593 = vlaneseq
        %v594 = vshrl.u32 %v593, 7
        %v595 = vsub.s32 0, %v594
        %v596 = vrot.slane %v572, %v595
        %v598 = vadd.f32 %v591, %v596
        %v599 = vlaneseq
        %v600 = vshrl.u32 %v599, 7
        %v601 = vlaneseq
        %v602 = vand.u32 %v601, 127
        %vm603 = vcmp.le.s32.totalorder %v602, %v600
        loop: start=0, step=1, limit=4
        $region105: #{tpu_custom_call.1} parent=75 // loop_pre_header
          _
        $region106: #{tpu_custom_call.1} parent=75 // loop_header
          %s605 = sphi 0, %s609
          %p606 = scmp.ge.s32.totalorder %s605, 4
          %v610 = vphi 0.0, %v1079
        $region107: #{tpu_custom_call.1} parent=75 // loop_header_branch
          %608 = sbr.rel (%p606) target = $region111
        $region108: #{tpu_custom_call.1} parent=75 // loop_body
          %s611 = smul.u32 %s605, 32
          %s612 = scalar_lea.vmem [#allocation5], %s611
          %v613 = vld [vmem:[%s612] sm:$0xff]
          %v614 = vld [vmem:[%s612 + $0x8] sm:$0xff]
          %v615 = vld [vmem:[%s612 + $0x10] sm:$0xff]
          %v616 = vld [vmem:[%s612 + $0x18] sm:$0xff]
          %s617 = scalar_lea.vmem [#allocation7], %s611
          %v618 = vld [vmem:[%s617] sm:$0xff]
          %v619 = vld [vmem:[%s617 + $0x8] sm:$0xff]
          %v620 = vld [vmem:[%s617 + $0x10] sm:$0xff]
          %v621 = vld [vmem:[%s617 + $0x18] sm:$0xff]
          %s622 = scalar_lea.vmem [#allocation8], %s611
          %v623 = vld [vmem:[%s622] sm:$0xff]
          %v624 = vld [vmem:[%s622 + $0x8] sm:$0xff]
          %v625 = vld [vmem:[%s622 + $0x10] sm:$0xff]
          %v626 = vld [vmem:[%s622 + $0x18] sm:$0xff]
          %s627 = scalar_lea.vmem [#allocation10], %s611
          %v628 = vld [vmem:[%s627] sm:$0xff]
          %v629 = vld [vmem:[%s627 + $0x8] sm:$0xff]
          %v630 = vld [vmem:[%s627 + $0x10] sm:$0xff]
          %v631 = vld [vmem:[%s627 + $0x18] sm:$0xff]
          %632 = vmatprep.subr.mxu0 0.0
          %633 = vmatpush1.xpose.msra.mxu0 %v613
          %634 = vmatprep.subr.mxu0 0.0
          %635 = vmatpush1.xpose.msra.mxu0 %v614
          %636 = vmatprep.subr.mxu0 0.0
          %637 = vmatpush1.xpose.msra.mxu0 %v615
          %638 = vmatprep.subr.mxu0 0.0
          %639 = vmatpush1.xpose.msra.mxu0 %v616
          %640 = vmatprep.subr.mxu0 0.0
          %641 = vmatpush1.xpose.msra.mxu0 0.0
          %642 = vmatprep.subr.mxu0 0.0
          %643 = vmatpush1.xpose.msra.mxu0 0.0
          %644 = vmatprep.subr.mxu0 0.0
          %645 = vmatpush1.xpose.msra.mxu0 0.0
          %646 = vmatprep.subr.mxu0 0.0
          %647 = vmatpush1.xpose.msra.mxu0 0.0
          %648 = vmatprep.subr.mxu0 0.0
          %649 = vmatpush1.xpose.msra.mxu0 0.0
          %650 = vmatprep.subr.mxu0 0.0
          %651 = vmatpush1.xpose.msra.mxu0 0.0
          %652 = vmatprep.subr.mxu0 0.0
          %653 = vmatpush1.xpose.msra.mxu0 0.0
          %654 = vmatprep.subr.mxu0 0.0
          %655 = vmatpush1.xpose.msra.mxu0 0.0
          %656 = vmatprep.subr.mxu0 0.0
          %657 = vmatpush1.xpose.msra.mxu0 0.0
          %658 = vmatprep.subr.mxu0 0.0
          %659 = vmatpush1.xpose.msra.mxu0 0.0
          %660 = vmatprep.subr.mxu0 0.0
          %661 = vmatpush1.xpose.msra.mxu0 0.0
          %662 = vmatprep.subr.mxu0 0.0
          %663 = vmatpush1.xpose.msra.mxu0 0.0
          %664 = vmatprep.subr.mxu0 0.0
          %665 = vmatpush1.xpose.msra.mxu0 0.0
          %666 = vmatprep.subr.mxu0 0.0
          %667 = vmatpush1.xpose.msra.mxu0 0.0
          %668 = vmatprep.subr.mxu0 0.0
          %669 = vmatpush1.xpose.msra.mxu0 0.0
          %670 = vmatprep.subr.mxu0 0.0
          %671 = vmatpush1.xpose.msra.mxu0 0.0
          %672 = vmatprep.subr.mxu0 0.0
          %673 = vmatpush1.xpose.msra.mxu0 0.0
          %674 = vmatprep.subr.mxu0 0.0
          %675 = vmatpush1.xpose.msra.mxu0 0.0
          %676 = vmatprep.subr.mxu0 0.0
          %677 = vmatpush1.xpose.msra.mxu0 0.0
          %678 = vmatprep.subr.mxu0 0.0
          %679 = vmatpush1.xpose.msra.mxu0 0.0
          %680 = vmatprep.subr.mxu0 0.0
          %681 = vmatpush1.xpose.msra.mxu0 0.0
          %682 = vmatprep.subr.mxu0 0.0
          %683 = vmatpush1.xpose.msra.mxu0 0.0
          %684 = vmatprep.subr.mxu0 0.0
          %685 = vmatpush1.xpose.msra.mxu0 0.0
          %686 = vmatprep.subr.mxu0 0.0
          %687 = vmatpush1.xpose.msra.mxu0 0.0
          %688 = vmatprep.subr.mxu0 0.0
          %689 = vmatpush1.xpose.msra.mxu0 0.0
          %690 = vmatprep.subr.mxu0 0.0
          %691 = vmatpush1.xpose.msra.mxu0 0.0
          %692 = vmatprep.subr.mxu0 0.0
          %693 = vmatpush1.xpose.msra.mxu0 0.0
          %694 = vmatprep.subr.mxu0 0.0
          %695 = vmatpush1.xpose.msra.mxu0 0.0
          %696 = vmatprep.mubr.f32.mxu0 0.0
          %697 = vmatmul.mubr.f32.gmra.mrb[0].mxu0 %v598
          %v698 = vpop.f32.mrb[0].mxu0
          %v699 = vadd.f32 0.0, %v698
          %v700 = vpop.f32.mrb[0].mxu0
          %701 = vdwg.mxu0
          %702 = vmatprep.subr.mxu0 0.0
          %703 = vmatpush1.xpose.msra.mxu0 %v618
          %704 = vmatprep.subr.mxu0 0.0
          %705 = vmatpush1.xpose.msra.mxu0 %v619
          %706 = vmatprep.subr.mxu0 0.0
          %707 = vmatpush1.xpose.msra.mxu0 %v620
          %708 = vmatprep.subr.mxu0 0.0
          %709 = vmatpush1.xpose.msra.mxu0 %v621
          %710 = vmatprep.subr.mxu0 0.0
          %711 = vmatpush1.xpose.msra.mxu0 0.0
          %712 = vmatprep.subr.mxu0 0.0
          %713 = vmatpush1.xpose.msra.mxu0 0.0
          %714 = vmatprep.subr.mxu0 0.0
          %715 = vmatpush1.xpose.msra.mxu0 0.0
          %716 = vmatprep.subr.mxu0 0.0
          %717 = vmatpush1.xpose.msra.mxu0 0.0
          %718 = vmatprep.subr.mxu0 0.0
          %719 = vmatpush1.xpose.msra.mxu0 0.0
          %720 = vmatprep.subr.mxu0 0.0
          %721 = vmatpush1.xpose.msra.mxu0 0.0
          %722 = vmatprep.subr.mxu0 0.0
          %723 = vmatpush1.xpose.msra.mxu0 0.0
          %724 = vmatprep.subr.mxu0 0.0
          %725 = vmatpush1.xpose.msra.mxu0 0.0
          %726 = vmatprep.subr.mxu0 0.0
          %727 = vmatpush1.xpose.msra.mxu0 0.0
          %728 = vmatprep.subr.mxu0 0.0
          %729 = vmatpush1.xpose.msra.mxu0 0.0
          %730 = vmatprep.subr.mxu0 0.0
          %731 = vmatpush1.xpose.msra.mxu0 0.0
          %732 = vmatprep.subr.mxu0 0.0
          %733 = vmatpush1.xpose.msra.mxu0 0.0
          %734 = vmatprep.subr.mxu0 0.0
          %735 = vmatpush1.xpose.msra.mxu0 0.0
          %736 = vmatprep.subr.mxu0 0.0
          %737 = vmatpush1.xpose.msra.mxu0 0.0
          %738 = vmatprep.subr.mxu0 0.0
          %739 = vmatpush1.xpose.msra.mxu0 0.0
          %740 = vmatprep.subr.mxu0 0.0
          %741 = vmatpush1.xpose.msra.mxu0 0.0
          %742 = vmatprep.subr.mxu0 0.0
          %743 = vmatpush1.xpose.msra.mxu0 0.0
          %744 = vmatprep.subr.mxu0 0.0
          %745 = vmatpush1.xpose.msra.mxu0 0.0
          %746 = vmatprep.subr.mxu0 0.0
          %747 = vmatpush1.xpose.msra.mxu0 0.0
          %748 = vmatprep.subr.mxu0 0.0
          %749 = vmatpush1.xpose.msra.mxu0 0.0
          %750 = vmatprep.subr.mxu0 0.0
          %751 = vmatpush1.xpose.msra.mxu0 0.0
          %752 = vmatprep.subr.mxu0 0.0
          %753 = vmatpush1.xpose.msra.mxu0 0.0
          %754 = vmatprep.subr.mxu0 0.0
          %755 = vmatpush1.xpose.msra.mxu0 0.0
          %756 = vmatprep.subr.mxu0 0.0
          %757 = vmatpush1.xpose.msra.mxu0 0.0
          %758 = vmatprep.subr.mxu0 0.0
          %759 = vmatpush1.xpose.msra.mxu0 0.0
          %760 = vmatprep.subr.mxu0 0.0
          %761 = vmatpush1.xpose.msra.mxu0 0.0
          %762 = vmatprep.subr.mxu0 0.0
          %763 = vmatpush1.xpose.msra.mxu0 0.0
          %764 = vmatprep.subr.mxu0 0.0
          %765 = vmatpush1.xpose.msra.mxu0 0.0
          %766 = vmatprep.mubr.f32.mxu0 0.0
          %767 = vmatmul.mubr.f32.gmra.mrb[0].mxu0 %v598
          %v768 = vpop.f32.mrb[0].mxu0
          %v769 = vadd.f32 0.0, %v768
          %v770 = vpop.f32.mrb[0].mxu0
          %771 = vdwg.mxu0
          %772 = vmatprep.subr.mxu0 0.0
          %773 = vmatpush1.xpose.msra.mxu0 %v623
          %774 = vmatprep.subr.mxu0 0.0
          %775 = vmatpush1.xpose.msra.mxu0 %v624
          %776 = vmatprep.subr.mxu0 0.0
          %777 = vmatpush1.xpose.msra.mxu0 %v625
          %778 = vmatprep.subr.mxu0 0.0
          %779 = vmatpush1.xpose.msra.mxu0 %v626
          %780 = vmatprep.subr.mxu0 0.0
          %781 = vmatpush1.xpose.msra.mxu0 0.0
          %782 = vmatprep.subr.mxu0 0.0
          %783 = vmatpush1.xpose.msra.mxu0 0.0
          %784 = vmatprep.subr.mxu0 0.0
          %785 = vmatpush1.xpose.msra.mxu0 0.0
          %786 = vmatprep.subr.mxu0 0.0
          %787 = vmatpush1.xpose.msra.mxu0 0.0
          %788 = vmatprep.subr.mxu0 0.0
          %789 = vmatpush1.xpose.msra.mxu0 0.0
          %790 = vmatprep.subr.mxu0 0.0
          %791 = vmatpush1.xpose.msra.mxu0 0.0
          %792 = vmatprep.subr.mxu0 0.0
          %793 = vmatpush1.xpose.msra.mxu0 0.0
          %794 = vmatprep.subr.mxu0 0.0
          %795 = vmatpush1.xpose.msra.mxu0 0.0
          %796 = vmatprep.subr.mxu0 0.0
          %797 = vmatpush1.xpose.msra.mxu0 0.0
          %798 = vmatprep.subr.mxu0 0.0
          %799 = vmatpush1.xpose.msra.mxu0 0.0
          %800 = vmatprep.subr.mxu0 0.0
          %801 = vmatpush1.xpose.msra.mxu0 0.0
          %802 = vmatprep.subr.mxu0 0.0
          %803 = vmatpush1.xpose.msra.mxu0 0.0
          %804 = vmatprep.subr.mxu0 0.0
          %805 = vmatpush1.xpose.msra.mxu0 0.0
          %806 = vmatprep.subr.mxu0 0.0
          %807 = vmatpush1.xpose.msra.mxu0 0.0
          %808 = vmatprep.subr.mxu0 0.0
          %809 = vmatpush1.xpose.msra.mxu0 0.0
          %810 = vmatprep.subr.mxu0 0.0
          %811 = vmatpush1.xpose.msra.mxu0 0.0
          %812 = vmatprep.subr.mxu0 0.0
          %813 = vmatpush1.xpose.msra.mxu0 0.0
          %814 = vmatprep.subr.mxu0 0.0
          %815 = vmatpush1.xpose.msra.mxu0 0.0
          %816 = vmatprep.subr.mxu0 0.0
          %817 = vmatpush1.xpose.msra.mxu0 0.0
          %818 = vmatprep.subr.mxu0 0.0
          %819 = vmatpush1.xpose.msra.mxu0 0.0
          %820 = vmatprep.subr.mxu0 0.0
          %821 = vmatpush1.xpose.msra.mxu0 0.0
          %822 = vmatprep.subr.mxu0 0.0
          %823 = vmatpush1.xpose.msra.mxu0 0.0
          %824 = vmatprep.subr.mxu0 0.0
          %825 = vmatpush1.xpose.msra.mxu0 0.0
          %826 = vmatprep.subr.mxu0 0.0
          %827 = vmatpush1.xpose.msra.mxu0 0.0
          %828 = vmatprep.subr.mxu0 0.0
          %829 = vmatpush1.xpose.msra.mxu0 0.0
          %830 = vmatprep.subr.mxu0 0.0
          %831 = vmatpush1.xpose.msra.mxu0 0.0
          %832 = vmatprep.subr.mxu0 0.0
          %833 = vmatpush1.xpose.msra.mxu0 0.0
          %834 = vmatprep.subr.mxu0 0.0
          %835 = vmatpush1.xpose.msra.mxu0 0.0
          %836 = vmatprep.mubr.f32.mxu0 0.0
          %837 = vmatmul.mubr.f32.gmra.mrb[0].mxu0 %v598
          %v838 = vpop.f32.mrb[0].mxu0
          %v839 = vadd.f32 0.0, %v838
          %v840 = vpop.f32.mrb[0].mxu0
          %841 = vdwg.mxu0
          %vm842 = vcmask 261120
          %v844 = vsel %vm842, %v699, 0
          %v847 = vsel %vm842, %v769, 0
          %849 = vmatprep.subr.mxu0 0.0
          %850 = vmatpush1.xpose.msra.mxu0 %v847
          %851 = vmatprep.subr.mxu0 0.0
          %852 = vmatpush1.xpose.msra.mxu0 0.0
          %853 = vmatprep.subr.mxu0 0.0
          %854 = vmatpush1.xpose.msra.mxu0 0.0
          %855 = vmatprep.subr.mxu0 0.0
          %856 = vmatpush1.xpose.msra.mxu0 0.0
          %857 = vmatprep.subr.mxu0 0.0
          %858 = vmatpush1.xpose.msra.mxu0 0.0
          %859 = vmatprep.subr.mxu0 0.0
          %860 = vmatpush1.xpose.msra.mxu0 0.0
          %861 = vmatprep.subr.mxu0 0.0
          %862 = vmatpush1.xpose.msra.mxu0 0.0
          %863 = vmatprep.subr.mxu0 0.0
          %864 = vmatpush1.xpose.msra.mxu0 0.0
          %865 = vmatprep.subr.mxu0 0.0
          %866 = vmatpush1.xpose.msra.mxu0 0.0
          %867 = vmatprep.subr.mxu0 0.0
          %868 = vmatpush1.xpose.msra.mxu0 0.0
          %869 = vmatprep.subr.mxu0 0.0
          %870 = vmatpush1.xpose.msra.mxu0 0.0
          %871 = vmatprep.subr.mxu0 0.0
          %872 = vmatpush1.xpose.msra.mxu0 0.0
          %873 = vmatprep.subr.mxu0 0.0
          %874 = vmatpush1.xpose.msra.mxu0 0.0
          %875 = vmatprep.subr.mxu0 0.0
          %876 = vmatpush1.xpose.msra.mxu0 0.0
          %877 = vmatprep.subr.mxu0 0.0
          %878 = vmatpush1.xpose.msra.mxu0 0.0
          %879 = vmatprep.subr.mxu0 0.0
          %880 = vmatpush1.xpose.msra.mxu0 0.0
          %881 = vmatprep.subr.mxu0 0.0
          %882 = vmatpush1.xpose.msra.mxu0 0.0
          %883 = vmatprep.subr.mxu0 0.0
          %884 = vmatpush1.xpose.msra.mxu0 0.0
          %885 = vmatprep.subr.mxu0 0.0
          %886 = vmatpush1.xpose.msra.mxu0 0.0
          %887 = vmatprep.subr.mxu0 0.0
          %888 = vmatpush1.xpose.msra.mxu0 0.0
          %889 = vmatprep.subr.mxu0 0.0
          %890 = vmatpush1.xpose.msra.mxu0 0.0
          %891 = vmatprep.subr.mxu0 0.0
          %892 = vmatpush1.xpose.msra.mxu0 0.0
          %893 = vmatprep.subr.mxu0 0.0
          %894 = vmatpush1.xpose.msra.mxu0 0.0
          %895 = vmatprep.subr.mxu0 0.0
          %896 = vmatpush1.xpose.msra.mxu0 0.0
          %897 = vmatprep.subr.mxu0 0.0
          %898 = vmatpush1.xpose.msra.mxu0 0.0
          %899 = vmatprep.subr.mxu0 0.0
          %900 = vmatpush1.xpose.msra.mxu0 0.0
          %901 = vmatprep.subr.mxu0 0.0
          %902 = vmatpush1.xpose.msra.mxu0 0.0
          %903 = vmatprep.subr.mxu0 0.0
          %904 = vmatpush1.xpose.msra.mxu0 0.0
          %905 = vmatprep.subr.mxu0 0.0
          %906 = vmatpush1.xpose.msra.mxu0 0.0
          %907 = vmatprep.subr.mxu0 0.0
          %908 = vmatpush1.xpose.msra.mxu0 0.0
          %909 = vmatprep.subr.mxu0 0.0
          %910 = vmatpush1.xpose.msra.mxu0 0.0
          %911 = vmatprep.subr.mxu0 0.0
          %912 = vmatpush1.xpose.msra.mxu0 0.0
          %913 = vmatprep.mubr.f32.mxu0 0.0
          %914 = vmatmul.mubr.f32.gmra.mrb[0].mxu0 %v844
          %v915 = vpop.f32.mrb[0].mxu0
          %v916 = vadd.f32 0.0, %v915
          %v917 = vpop.f32.mrb[0].mxu0
          %918 = vdwg.mxu0
          %v919 = vmul.f32 %v916, 0.17677669
          %v920 = vsel %vm603, %v919, -1e+30
          %vm921 = vcmask 64512
          %v922 = vsel %vm921, %v920, -inf
          %923 = vmax.xlane.f32.xlu0 %v922
          %v924 = vpop.xlane.xlu0 %923
          %v925 = vsub.f32 %v920, %v924
          %v926 = vmul.f32 %v925, 1.442695
          %v927 = vpow.pop %v926
          %v928 = vsel %vm921, %v927, 0.0
          %929 = vadd.xlane.f32.xlu0 %v928
          %v930 = vpop.xlane.xlu0 %929
          %v931 = vrcp.pop %v930
          %v932 = vmul.f32 %v927, %v931
          %v934 = vsel %vm921, %v932, 0
          %936 = vmatprep.subr.mxu0 0.0
          %937 = vmatpush1.msra.mxu0 %v839
          %938 = vmatprep.subr.mxu0 0.0
          %939 = vmatpush1.msra.mxu0 0.0
          %940 = vmatprep.subr.mxu0 0.0
          %941 = vmatpush1.msra.mxu0 0.0
          %942 = vmatprep.subr.mxu0 0.0
          %943 = vmatpush1.msra.mxu0 0.0
          %944 = vmatprep.subr.mxu0 0.0
          %945 = vmatpush1.msra.mxu0 0.0
          %946 = vmatprep.subr.mxu0 0.0
          %947 = vmatpush1.msra.mxu0 0.0
          %948 = vmatprep.subr.mxu0 0.0
          %949 = vmatpush1.msra.mxu0 0.0
          %950 = vmatprep.subr.mxu0 0.0
          %951 = vmatpush1.msra.mxu0 0.0
          %952 = vmatprep.subr.mxu0 0.0
          %953 = vmatpush1.msra.mxu0 0.0
          %954 = vmatprep.subr.mxu0 0.0
          %955 = vmatpush1.msra.mxu0 0.0
          %956 = vmatprep.subr.mxu0 0.0
          %957 = vmatpush1.msra.mxu0 0.0
          %958 = vmatprep.subr.mxu0 0.0
          %959 = vmatpush1.msra.mxu0 0.0
          %960 = vmatprep.subr.mxu0 0.0
          %961 = vmatpush1.msra.mxu0 0.0
          %962 = vmatprep.subr.mxu0 0.0
          %963 = vmatpush1.msra.mxu0 0.0
          %964 = vmatprep.subr.mxu0 0.0
          %965 = vmatpush1.msra.mxu0 0.0
          %966 = vmatprep.subr.mxu0 0.0
          %967 = vmatpush1.msra.mxu0 0.0
          %968 = vmatprep.subr.mxu0 0.0
          %969 = vmatpush1.msra.mxu0 0.0
          %970 = vmatprep.subr.mxu0 0.0
          %971 = vmatpush1.msra.mxu0 0.0
          %972 = vmatprep.subr.mxu0 0.0
          %973 = vmatpush1.msra.mxu0 0.0
          %974 = vmatprep.subr.mxu0 0.0
          %975 = vmatpush1.msra.mxu0 0.0
          %976 = vmatprep.subr.mxu0 0.0
          %977 = vmatpush1.msra.mxu0 0.0
          %978 = vmatprep.subr.mxu0 0.0
          %979 = vmatpush1.msra.mxu0 0.0
          %980 = vmatprep.subr.mxu0 0.0
          %981 = vmatpush1.msra.mxu0 0.0
          %982 = vmatprep.subr.mxu0 0.0
          %983 = vmatpush1.msra.mxu0 0.0
          %984 = vmatprep.subr.mxu0 0.0
          %985 = vmatpush1.msra.mxu0 0.0
          %986 = vmatprep.subr.mxu0 0.0
          %987 = vmatpush1.msra.mxu0 0.0
          %988 = vmatprep.subr.mxu0 0.0
          %989 = vmatpush1.msra.mxu0 0.0
          %990 = vmatprep.subr.mxu0 0.0
          %991 = vmatpush1.msra.mxu0 0.0
          %992 = vmatprep.subr.mxu0 0.0
          %993 = vmatpush1.msra.mxu0 0.0
          %994 = vmatprep.subr.mxu0 0.0
          %995 = vmatpush1.msra.mxu0 0.0
          %996 = vmatprep.subr.mxu0 0.0
          %997 = vmatpush1.msra.mxu0 0.0
          %998 = vmatprep.subr.mxu0 0.0
          %999 = vmatpush1.msra.mxu0 0.0
          %1000 = vmatprep.mubr.f32.mxu0 0.0
          %1001 = vmatmul.mubr.f32.gmra.mrb[0].mxu0 %v934
          %v1002 = vpop.f32.mrb[0].mxu0
          %v1003 = vadd.f32 0.0, %v1002
          %v1004 = vpop.f32.mrb[0].mxu0
          %1005 = vdwg.mxu0
          %v1007 = vsel %vm842, %v1003, 0
          %1009 = vmatprep.subr.mxu0 0.0
          %1010 = vmatpush1.msra.mxu0 %v628
          %1011 = vmatprep.subr.mxu0 0.0
          %1012 = vmatpush1.msra.mxu0 %v629
          %1013 = vmatprep.subr.mxu0 0.0
          %1014 = vmatpush1.msra.mxu0 %v630
          %1015 = vmatprep.subr.mxu0 0.0
          %1016 = vmatpush1.msra.mxu0 %v631
          %1017 = vmatprep.subr.mxu0 0.0
          %1018 = vmatpush1.msra.mxu0 0.0
          %1019 = vmatprep.subr.mxu0 0.0
          %1020 = vmatpush1.msra.mxu0 0.0
          %1021 = vmatprep.subr.mxu0 0.0
          %1022 = vmatpush1.msra.mxu0 0.0
          %1023 = vmatprep.subr.mxu0 0.0
          %1024 = vmatpush1.msra.mxu0 0.0
          %1025 = vmatprep.subr.mxu0 0.0
          %1026 = vmatpush1.msra.mxu0 0.0
          %1027 = vmatprep.subr.mxu0 0.0
          %1028 = vmatpush1.msra.mxu0 0.0
          %1029 = vmatprep.subr.mxu0 0.0
          %1030 = vmatpush1.msra.mxu0 0.0
          %1031 = vmatprep.subr.mxu0 0.0
          %1032 = vmatpush1.msra.mxu0 0.0
          %1033 = vmatprep.subr.mxu0 0.0
          %1034 = vmatpush1.msra.mxu0 0.0
          %1035 = vmatprep.subr.mxu0 0.0
          %1036 = vmatpush1.msra.mxu0 0.0
          %1037 = vmatprep.subr.mxu0 0.0
          %1038 = vmatpush1.msra.mxu0 0.0
          %1039 = vmatprep.subr.mxu0 0.0
          %1040 = vmatpush1.msra.mxu0 0.0
          %1041 = vmatprep.subr.mxu0 0.0
          %1042 = vmatpush1.msra.mxu0 0.0
          %1043 = vmatprep.subr.mxu0 0.0
          %1044 = vmatpush1.msra.mxu0 0.0
          %1045 = vmatprep.subr.mxu0 0.0
          %1046 = vmatpush1.msra.mxu0 0.0
          %1047 = vmatprep.subr.mxu0 0.0
          %1048 = vmatpush1.msra.mxu0 0.0
          %1049 = vmatprep.subr.mxu0 0.0
          %1050 = vmatpush1.msra.mxu0 0.0
          %1051 = vmatprep.subr.mxu0 0.0
          %1052 = vmatpush1.msra.mxu0 0.0
          %1053 = vmatprep.subr.mxu0 0.0
          %1054 = vmatpush1.msra.mxu0 0.0
          %1055 = vmatprep.subr.mxu0 0.0
          %1056 = vmatpush1.msra.mxu0 0.0
          %1057 = vmatprep.subr.mxu0 0.0
          %1058 = vmatpush1.msra.mxu0 0.0
          %1059 = vmatprep.subr.mxu0 0.0
          %1060 = vmatpush1.msra.mxu0 0.0
          %1061 = vmatprep.subr.mxu0 0.0
          %1062 = vmatpush1.msra.mxu0 0.0
          %1063 = vmatprep.subr.mxu0 0.0
          %1064 = vmatpush1.msra.mxu0 0.0
          %1065 = vmatprep.subr.mxu0 0.0
          %1066 = vmatpush1.msra.mxu0 0.0
          %1067 = vmatprep.subr.mxu0 0.0
          %1068 = vmatpush1.msra.mxu0 0.0
          %1069 = vmatprep.subr.mxu0 0.0
          %1070 = vmatpush1.msra.mxu0 0.0
          %1071 = vmatprep.subr.mxu0 0.0
          %1072 = vmatpush1.msra.mxu0 0.0
          %1073 = vmatprep.mubr.f32.mxu0 0.0
          %1074 = vmatmul.mubr.f32.gmra.mrb[0].mxu0 %v1007
          %v1075 = vpop.f32.mrb[0].mxu0
          %v1076 = vadd.f32 0.0, %v1075
          %v1077 = vpop.f32.mrb[0].mxu0
          %1078 = vdwg.mxu0
          %v1079 = vadd.f32 %v610, %v1076
        $region109: #{tpu_custom_call.1} parent=75 // loop_footer
          %s609 = sadd.s32 1, %s605
        $region110: #{tpu_custom_call.1} parent=75 // loop_footer_branch
          %604 = sbr.rel target = $region106
        $region111: #{tpu_custom_call.1} parent=75 // loop_exit
          _
        %v1080 = vld [vmem:[%s7] sm:$0x1]
        %v1082 = vlaneseq
        %v1083 = vshrl.u32 %v1082, 7
        %v1084 = vsub.s32 0, %v1083
        %v1085 = vrot.slane %v1080, %v1084
        %v1087 = vadd.f32 %v610, %v1085
        %v1088 = vadd.f32 %v1087, %v570
        %v1089 = vld [vmem:[%s8] sm:$0x1]
        %v1090 = vld [vmem:[%s9] sm:$0x1]
        %1091 = vadd.xlane.f32.xlu0 %v1088
        %v1092 = vpop.xlane.xlu0 %1091
        %v1093 = vmul.f32 %v1092, %v575
        %v1094 = vsub.f32 %v1088, %v1093
        %v1095 = vmul.f32 %v1094, %v1094
        %1096 = vadd.xlane.f32.xlu0 %v1095
        %v1097 = vpop.xlane.xlu0 %1096
        %v1098 = vmul.f32 %v1097, %v575
        %v1099 = vadd.f32 %v1098, 1e-05
        %v1100 = vrsqrt.pop %v1099
        %v1101 = vmul.f32 %v1094, %v1100
        %v1103 = vlaneseq
        %v1104 = vshrl.u32 %v1103, 7
        %v1105 = vsub.s32 0, %v1104
        %v1106 = vrot.slane %v1089, %v1105
        %v1108 = vmul.f32 %v1106, %v1101
        %v1110 = vlaneseq
        %v1111 = vshrl.u32 %v1110, 7
        %v1112 = vsub.s32 0, %v1111
        %v1113 = vrot.slane %v1090, %v1112
        %v1115 = vadd.f32 %v1108, %v1113
        %v1116 = vld [vmem:[#allocation11] sm:$0xff]
        %v1117 = vld [vmem:[#allocation11 + $0x8] sm:$0xff]
        %v1118 = vld [vmem:[#allocation11 + $0x10] sm:$0xff]
        %v1119 = vld [vmem:[#allocation11 + $0x18] sm:$0xff]
        %v1120 = vld [vmem:[#allocation11 + $0x20] sm:$0xff]
        %v1121 = vld [vmem:[#allocation11 + $0x28] sm:$0xff]
        %v1122 = vld [vmem:[#allocation11 + $0x30] sm:$0xff]
        %v1123 = vld [vmem:[#allocation11 + $0x38] sm:$0xff]
        %v1124 = vld [vmem:[#allocation11 + $0x40] sm:$0xff]
        %v1125 = vld [vmem:[#allocation11 + $0x48] sm:$0xff]
        %v1126 = vld [vmem:[#allocation11 + $0x50] sm:$0xff]
        %v1127 = vld [vmem:[#allocation11 + $0x58] sm:$0xff]
        %v1128 = vld [vmem:[#allocation11 + $0x60] sm:$0xff]
        %v1129 = vld [vmem:[#allocation11 + $0x68] sm:$0xff]
        %v1130 = vld [vmem:[#allocation11 + $0x70] sm:$0xff]
        %v1131 = vld [vmem:[#allocation11 + $0x78] sm:$0xff]
        %v1132 = vld [vmem:[#allocation11 + $0x80] sm:$0xff]
        %v1133 = vld [vmem:[#allocation11 + $0x88] sm:$0xff]
        %v1134 = vld [vmem:[#allocation11 + $0x90] sm:$0xff]
        %v1135 = vld [vmem:[#allocation11 + $0x98] sm:$0xff]
        %v1136 = vld [vmem:[#allocation11 + $0xa0] sm:$0xff]
        %v1137 = vld [vmem:[#allocation11 + $0xa8] sm:$0xff]
        %v1138 = vld [vmem:[#allocation11 + $0xb0] sm:$0xff]
        %v1139 = vld [vmem:[#allocation11 + $0xb8] sm:$0xff]
        %v1140 = vld [vmem:[#allocation11 + $0xc0] sm:$0xff]
        %v1141 = vld [vmem:[#allocation11 + $0xc8] sm:$0xff]
        %v1142 = vld [vmem:[#allocation11 + $0xd0] sm:$0xff]
        %v1143 = vld [vmem:[#allocation11 + $0xd8] sm:$0xff]
        %v1144 = vld [vmem:[#allocation11 + $0xe0] sm:$0xff]
        %v1145 = vld [vmem:[#allocation11 + $0xe8] sm:$0xff]
        %v1146 = vld [vmem:[#allocation11 + $0xf0] sm:$0xff]
        %v1147 = vld [vmem:[#allocation11 + $0xf8] sm:$0xff]
        %v1148 = vld [vmem:[#allocation11 + $0x100] sm:$0xff]
        %v1149 = vld [vmem:[#allocation11 + $0x108] sm:$0xff]
        %v1150 = vld [vmem:[#allocation11 + $0x110] sm:$0xff]
        %v1151 = vld [vmem:[#allocation11 + $0x118] sm:$0xff]
        %v1152 = vld [vmem:[#allocation11 + $0x120] sm:$0xff]
        %v1153 = vld [vmem:[#allocation11 + $0x128] sm:$0xff]
        %v1154 = vld [vmem:[#allocation11 + $0x130] sm:$0xff]
        %v1155 = vld [vmem:[#allocation11 + $0x138] sm:$0xff]
        %v1156 = vld [vmem:[#allocation11 + $0x140] sm:$0xff]
        %v1157 = vld [vmem:[#allocation11 + $0x148] sm:$0xff]
        %v1158 = vld [vmem:[#allocation11 + $0x150] sm:$0xff]
        %v1159 = vld [vmem:[#allocation11 + $0x158] sm:$0xff]
        %v1160 = vld [vmem:[#allocation11 + $0x160] sm:$0xff]
        %v1161 = vld [vmem:[#allocation11 + $0x168] sm:$0xff]
        %v1162 = vld [vmem:[#allocation11 + $0x170] sm:$0xff]
        %v1163 = vld [vmem:[#allocation11 + $0x178] sm:$0xff]
        %v1164 = vld [vmem:[#allocation11 + $0x180] sm:$0xff]
        %v1165 = vld [vmem:[#allocation11 + $0x188] sm:$0xff]
        %v1166 = vld [vmem:[#allocation11 + $0x190] sm:$0xff]
        %v1167 = vld [vmem:[#allocation11 + $0x198] sm:$0xff]
        %v1168 = vld [vmem:[#allocation11 + $0x1a0] sm:$0xff]
        %v1169 = vld [vmem:[#allocation11 + $0x1a8] sm:$0xff]
        %v1170 = vld [vmem:[#allocation11 + $0x1b0] sm:$0xff]
        %v1171 = vld [vmem:[#allocation11 + $0x1b8] sm:$0xff]
        %v1172 = vld [vmem:[#allocation11 + $0x1c0] sm:$0xff]
        %v1173 = vld [vmem:[#allocation11 + $0x1c8] sm:$0xff]
        %v1174 = vld [vmem:[#allocation11 + $0x1d0] sm:$0xff]
        %v1175 = vld [vmem:[#allocation11 + $0x1d8] sm:$0xff]
        %v1176 = vld [vmem:[#allocation11 + $0x1e0] sm:$0xff]
        %v1177 = vld [vmem:[#allocation11 + $0x1e8] sm:$0xff]
        %v1178 = vld [vmem:[#allocation11 + $0x1f0] sm:$0xff]
        %v1179 = vld [vmem:[#allocation11 + $0x1f8] sm:$0xff]
        %v1180 = vld [vmem:[%s11] sm:$0xf]
        %v1182 = vlaneseq
        %v1183 = vshrl.u32 %v1182, 7
        %v1184 = vsub.s32 0, %v1183
        %v1185 = vrot.slane %v1180, %v1184
        %v1186 = vlaneseq
        %v1187 = vshrl.u32 %v1186, 7
        %v1188 = vsub.s32 1, %v1187
        %v1189 = vrot.slane %v1180, %v1188
        %v1190 = vlaneseq
        %v1191 = vshrl.u32 %v1190, 7
        %v1192 = vsub.s32 2, %v1191
        %v1193 = vrot.slane %v1180, %v1192
        %v1194 = vlaneseq
        %v1195 = vshrl.u32 %v1194, 7
        %v1196 = vsub.s32 3, %v1195
        %v1197 = vrot.slane %v1180, %v1196
        %1202 = vmatprep.subr.mxu0 %v1117
        %1203 = vmatpush1.msra.mxu0 %v1116
        %1204 = vmatprep.subr.mxu0 %v1121
        %1205 = vmatpush1.msra.mxu0 %v1120
        %1206 = vmatprep.subr.mxu0 %v1125
        %1207 = vmatpush1.msra.mxu0 %v1124
        %1208 = vmatprep.subr.mxu0 %v1129
        %1209 = vmatpush1.msra.mxu0 %v1128
        %1210 = vmatprep.subr.mxu0 %v1133
        %1211 = vmatpush1.msra.mxu0 %v1132
        %1212 = vmatprep.subr.mxu0 %v1137
        %1213 = vmatpush1.msra.mxu0 %v1136
        %1214 = vmatprep.subr.mxu0 %v1141
        %1215 = vmatpush1.msra.mxu0 %v1140
        %1216 = vmatprep.subr.mxu0 %v1145
        %1217 = vmatpush1.msra.mxu0 %v1144
        %1218 = vmatprep.subr.mxu0 %v1149
        %1219 = vmatpush1.msra.mxu0 %v1148
        %1220 = vmatprep.subr.mxu0 %v1153
        %1221 = vmatpush1.msra.mxu0 %v1152
        %1222 = vmatprep.subr.mxu0 %v1157
        %1223 = vmatpush1.msra.mxu0 %v1156
        %1224 = vmatprep.subr.mxu0 %v1161
        %1225 = vmatpush1.msra.mxu0 %v1160
        %1226 = vmatprep.subr.mxu0 %v1165
        %1227 = vmatpush1.msra.mxu0 %v1164
        %1228 = vmatprep.subr.mxu0 %v1169
        %1229 = vmatpush1.msra.mxu0 %v1168
        %1230 = vmatprep.subr.mxu0 %v1173
        %1231 = vmatpush1.msra.mxu0 %v1172
        %1232 = vmatprep.subr.mxu0 %v1177
        %1233 = vmatpush1.msra.mxu0 %v1176
        %1234 = vmatprep.subr.mxu0 0.0
        %1235 = vmatpush1.msra.mxu0 0.0
        %1236 = vmatprep.subr.mxu0 0.0
        %1237 = vmatpush1.msra.mxu0 0.0
        %1238 = vmatprep.subr.mxu0 0.0
        %1239 = vmatpush1.msra.mxu0 0.0
        %1240 = vmatprep.subr.mxu0 0.0
        %1241 = vmatpush1.msra.mxu0 0.0
        %1242 = vmatprep.subr.mxu0 0.0
        %1243 = vmatpush1.msra.mxu0 0.0
        %1244 = vmatprep.subr.mxu0 0.0
        %1245 = vmatpush1.msra.mxu0 0.0
        %1246 = vmatprep.subr.mxu0 0.0
        %1247 = vmatpush1.msra.mxu0 0.0
        %1248 = vmatprep.subr.mxu0 0.0
        %1249 = vmatpush1.msra.mxu0 0.0
        %1250 = vmatprep.subr.mxu0 0.0
        %1251 = vmatpush1.msra.mxu0 0.0
        %1252 = vmatprep.subr.mxu0 0.0
        %1253 = vmatpush1.msra.mxu0 0.0
        %1254 = vmatprep.subr.mxu0 0.0
        %1255 = vmatpush1.msra.mxu0 0.0
        %1256 = vmatprep.subr.mxu0 0.0
        %1257 = vmatpush1.msra.mxu0 0.0
        %1258 = vmatprep.subr.mxu0 0.0
        %1259 = vmatpush1.msra.mxu0 0.0
        %1260 = vmatprep.subr.mxu0 0.0
        %1261 = vmatpush1.msra.mxu0 0.0
        %1262 = vmatprep.subr.mxu0 0.0
        %1263 = vmatpush1.msra.mxu0 0.0
        %1264 = vmatprep.subr.mxu0 0.0
        %1265 = vmatpush1.msra.mxu0 0.0
        %1266 = vmatprep.mubr.f32.mxu0 0.0
        %1267 = vmatmul.mubr.f32.gmra.mrb[0].mxu0 %v1115
        %v1268 = vpop.f32.mrb[0].mxu0
        %v1269 = vadd.f32 %v1185, %v1268
        %v1270 = vpop.f32.mrb[0].mxu0
        %v1271 = vadd.f32 %v1189, %v1270
        %1272 = vdwg.mxu0
        %1273 = vmatprep.subr.mxu0 %v1119
        %1274 = vmatpush1.msra.mxu0 %v1118
        %1275 = vmatprep.subr.mxu0 %v1123
        %1276 = vmatpush1.msra.mxu0 %v1122
        %1277 = vmatprep.subr.mxu0 %v1127
        %1278 = vmatpush1.msra.mxu0 %v1126
        %1279 = vmatprep.subr.mxu0 %v1131
        %1280 = vmatpush1.msra.mxu0 %v1130
        %1281 = vmatprep.subr.mxu0 %v1135
        %1282 = vmatpush1.msra.mxu0 %v1134
        %1283 = vmatprep.subr.mxu0 %v1139
        %1284 = vmatpush1.msra.mxu0 %v1138
        %1285 = vmatprep.subr.mxu0 %v1143
        %1286 = vmatpush1.msra.mxu0 %v1142
        %1287 = vmatprep.subr.mxu0 %v1147
        %1288 = vmatpush1.msra.mxu0 %v1146
        %1289 = vmatprep.subr.mxu0 %v1151
        %1290 = vmatpush1.msra.mxu0 %v1150
        %1291 = vmatprep.subr.mxu0 %v1155
        %1292 = vmatpush1.msra.mxu0 %v1154
        %1293 = vmatprep.subr.mxu0 %v1159
        %1294 = vmatpush1.msra.mxu0 %v1158
        %1295 = vmatprep.subr.mxu0 %v1163
        %1296 = vmatpush1.msra.mxu0 %v1162
        %1297 = vmatprep.subr.mxu0 %v1167
        %1298 = vmatpush1.msra.mxu0 %v1166
        %1299 = vmatprep.subr.mxu0 %v1171
        %1300 = vmatpush1.msra.mxu0 %v1170
        %1301 = vmatprep.subr.mxu0 %v1175
        %1302 = vmatpush1.msra.mxu0 %v1174
        %1303 = vmatprep.subr.mxu0 %v1179
        %1304 = vmatpush1.msra.mxu0 %v1178
        %1305 = vmatprep.subr.mxu0 0.0
        %1306 = vmatpush1.msra.mxu0 0.0
        %1307 = vmatprep.subr.mxu0 0.0
        %1308 = vmatpush1.msra.mxu0 0.0
        %1309 = vmatprep.subr.mxu0 0.0
        %1310 = vmatpush1.msra.mxu0 0.0
        %1311 = vmatprep.subr.mxu0 0.0
        %1312 = vmatpush1.msra.mxu0 0.0
        %1313 = vmatprep.subr.mxu0 0.0
        %1314 = vmatpush1.msra.mxu0 0.0
        %1315 = vmatprep.subr.mxu0 0.0
        %1316 = vmatpush1.msra.mxu0 0.0
        %1317 = vmatprep.subr.mxu0 0.0
        %1318 = vmatpush1.msra.mxu0 0.0
        %1319 = vmatprep.subr.mxu0 0.0
        %1320 = vmatpush1.msra.mxu0 0.0
        %1321 = vmatprep.subr.mxu0 0.0
        %1322 = vmatpush1.msra.mxu0 0.0
        %1323 = vmatprep.subr.mxu0 0.0
        %1324 = vmatpush1.msra.mxu0 0.0
        %1325 = vmatprep.subr.mxu0 0.0
        %1326 = vmatpush1.msra.mxu0 0.0
        %1327 = vmatprep.subr.mxu0 0.0
        %1328 = vmatpush1.msra.mxu0 0.0
        %1329 = vmatprep.subr.mxu0 0.0
        %1330 = vmatpush1.msra.mxu0 0.0
        %1331 = vmatprep.subr.mxu0 0.0
        %1332 = vmatpush1.msra.mxu0 0.0
        %1333 = vmatprep.subr.mxu0 0.0
        %1334 = vmatpush1.msra.mxu0 0.0
        %1335 = vmatprep.subr.mxu0 0.0
        %1336 = vmatpush1.msra.mxu0 0.0
        %1337 = vmatprep.mubr.f32.mxu0 0.0
        %1338 = vmatmul.mubr.f32.gmra.mrb[0].mxu0 %v1115
        %v1339 = vpop.f32.mrb[0].mxu0
        %v1340 = vadd.f32 %v1193, %v1339
        %v1341 = vpop.f32.mrb[0].mxu0
        %v1342 = vadd.f32 %v1197, %v1341
        %1343 = vdwg.mxu0
        %v1344 = vmul.f32 %v1269, 0.5
        %v1345 = vmul.f32 %v1271, 0.5
        %v1346 = vmul.f32 %v1340, 0.5
        %v1347 = vmul.f32 %v1342, 0.5
        %v1348 = vmul.f32 %v1269, 0.044715
        %v1349 = vmul.f32 %v1271, 0.044715
        %v1350 = vmul.f32 %v1340, 0.044715
        %v1351 = vmul.f32 %v1342, 0.044715
        %v1352 = vmul.f32 %v1348, %v1269
        %v1353 = vmul.f32 %v1349, %v1271
        %v1354 = vmul.f32 %v1350, %v1340
        %v1355 = vmul.f32 %v1351, %v1342
        %v1356 = vmul.f32 %v1352, %v1269
        %v1357 = vmul.f32 %v1353, %v1271
        %v1358 = vmul.f32 %v1354, %v1340
        %v1359 = vmul.f32 %v1355, %v1342
        %v1360 = vadd.f32 %v1269, %v1356
        %v1361 = vadd.f32 %v1271, %v1357
        %v1362 = vadd.f32 %v1340, %v1358
        %v1363 = vadd.f32 %v1342, %v1359
        %v1364 = vmul.f32 %v1360, 0.7978846
        %v1365 = vmul.f32 %v1361, 0.7978846
        %v1366 = vmul.f32 %v1362, 0.7978846
        %v1367 = vmul.f32 %v1363, 0.7978846
        %v1368 = vtanh.pop %v1364
        %v1369 = vtanh.pop %v1365
        %v1370 = vtanh.pop %v1366
        %v1371 = vtanh.pop %v1367
        %v1372 = vadd.f32 %v1368, 1.0
        %v1373 = vadd.f32 %v1369, 1.0
        %v1374 = vadd.f32 %v1370, 1.0
        %v1375 = vadd.f32 %v1371, 1.0
        %v1376 = vmul.f32 %v1344, %v1372
        %v1377 = vmul.f32 %v1345, %v1373
        %v1378 = vmul.f32 %v1346, %v1374
        %v1379 = vmul.f32 %v1347, %v1375
        %v1380 = vld [vmem:[#allocation13] sm:$0xff]
        %v1381 = vld [vmem:[#allocation13 + $0x8] sm:$0xff]
        %v1382 = vld [vmem:[#allocation13 + $0x10] sm:$0xff]
        %v1383 = vld [vmem:[#allocation13 + $0x18] sm:$0xff]
        %v1384 = vld [vmem:[#allocation13 + $0x20] sm:$0xff]
        %v1385 = vld [vmem:[#allocation13 + $0x28] sm:$0xff]
        %v1386 = vld [vmem:[#allocation13 + $0x30] sm:$0xff]
        %v1387 = vld [vmem:[#allocation13 + $0x38] sm:$0xff]
        %v1388 = vld [vmem:[#allocation13 + $0x40] sm:$0xff]
        %v1389 = vld [vmem:[#allocation13 + $0x48] sm:$0xff]
        %v1390 = vld [vmem:[#allocation13 + $0x50] sm:$0xff]
        %v1391 = vld [vmem:[#allocation13 + $0x58] sm:$0xff]
        %v1392 = vld [vmem:[#allocation13 + $0x60] sm:$0xff]
        %v1393 = vld [vmem:[#allocation13 + $0x68] sm:$0xff]
        %v1394 = vld [vmem:[#allocation13 + $0x70] sm:$0xff]
        %v1395 = vld [vmem:[#allocation13 + $0x78] sm:$0xff]
        %v1396 = vld [vmem:[#allocation13 + $0x80] sm:$0xff]
        %v1397 = vld [vmem:[#allocation13 + $0x88] sm:$0xff]
        %v1398 = vld [vmem:[#allocation13 + $0x90] sm:$0xff]
        %v1399 = vld [vmem:[#allocation13 + $0x98] sm:$0xff]
        %v1400 = vld [vmem:[#allocation13 + $0xa0] sm:$0xff]
        %v1401 = vld [vmem:[#allocation13 + $0xa8] sm:$0xff]
        %v1402 = vld [vmem:[#allocation13 + $0xb0] sm:$0xff]
        %v1403 = vld [vmem:[#allocation13 + $0xb8] sm:$0xff]
        %v1404 = vld [vmem:[#allocation13 + $0xc0] sm:$0xff]
        %v1405 = vld [vmem:[#allocation13 + $0xc8] sm:$0xff]
        %v1406 = vld [vmem:[#allocation13 + $0xd0] sm:$0xff]
        %v1407 = vld [vmem:[#allocation13 + $0xd8] sm:$0xff]
        %v1408 = vld [vmem:[#allocation13 + $0xe0] sm:$0xff]
        %v1409 = vld [vmem:[#allocation13 + $0xe8] sm:$0xff]
        %v1410 = vld [vmem:[#allocation13 + $0xf0] sm:$0xff]
        %v1411 = vld [vmem:[#allocation13 + $0xf8] sm:$0xff]
        %v1412 = vld [vmem:[#allocation13 + $0x100] sm:$0xff]
        %v1413 = vld [vmem:[#allocation13 + $0x108] sm:$0xff]
        %v1414 = vld [vmem:[#allocation13 + $0x110] sm:$0xff]
        %v1415 = vld [vmem:[#allocation13 + $0x118] sm:$0xff]
        %v1416 = vld [vmem:[#allocation13 + $0x120] sm:$0xff]
        %v1417 = vld [vmem:[#allocation13 + $0x128] sm:$0xff]
        %v1418 = vld [vmem:[#allocation13 + $0x130] sm:$0xff]
        %v1419 = vld [vmem:[#allocation13 + $0x138] sm:$0xff]
        %v1420 = vld [vmem:[#allocation13 + $0x140] sm:$0xff]
        %v1421 = vld [vmem:[#allocation13 + $0x148] sm:$0xff]
        %v1422 = vld [vmem:[#allocation13 + $0x150] sm:$0xff]
        %v1423 = vld [vmem:[#allocation13 + $0x158] sm:$0xff]
        %v1424 = vld [vmem:[#allocation13 + $0x160] sm:$0xff]
        %v1425 = vld [vmem:[#allocation13 + $0x168] sm:$0xff]
        %v1426 = vld [vmem:[#allocation13 + $0x170] sm:$0xff]
        %v1427 = vld [vmem:[#allocation13 + $0x178] sm:$0xff]
        %v1428 = vld [vmem:[#allocation13 + $0x180] sm:$0xff]
        %v1429 = vld [vmem:[#allocation13 + $0x188] sm:$0xff]
        %v1430 = vld [vmem:[#allocation13 + $0x190] sm:$0xff]
        %v1431 = vld [vmem:[#allocation13 + $0x198] sm:$0xff]
        %v1432 = vld [vmem:[#allocation13 + $0x1a0] sm:$0xff]
        %v1433 = vld [vmem:[#allocation13 + $0x1a8] sm:$0xff]
        %v1434 = vld [vmem:[#allocation13 + $0x1b0] sm:$0xff]
        %v1435 = vld [vmem:[#allocation13 + $0x1b8] sm:$0xff]
        %v1436 = vld [vmem:[#allocation13 + $0x1c0] sm:$0xff]
        %v1437 = vld [vmem:[#allocation13 + $0x1c8] sm:$0xff]
        %v1438 = vld [vmem:[#allocation13 + $0x1d0] sm:$0xff]
        %v1439 = vld [vmem:[#allocation13 + $0x1d8] sm:$0xff]
        %v1440 = vld [vmem:[#allocation13 + $0x1e0] sm:$0xff]
        %v1441 = vld [vmem:[#allocation13 + $0x1e8] sm:$0xff]
        %v1442 = vld [vmem:[#allocation13 + $0x1f0] sm:$0xff]
        %v1443 = vld [vmem:[#allocation13 + $0x1f8] sm:$0xff]
        %v1444 = vld [vmem:[%s13] sm:$0x1]
        %v1446 = vlaneseq
        %v1447 = vshrl.u32 %v1446, 7
        %v1448 = vsub.s32 0, %v1447
        %v1449 = vrot.slane %v1444, %v1448
        %1451 = vmatprep.subr.mxu0 0.0
        %1452 = vmatpush1.msra.mxu0 %v1380
        %1453 = vmatprep.subr.mxu0 0.0
        %1454 = vmatpush1.msra.mxu0 %v1381
        %1455 = vmatprep.subr.mxu0 0.0
        %1456 = vmatpush1.msra.mxu0 %v1382
        %1457 = vmatprep.subr.mxu0 0.0
        %1458 = vmatpush1.msra.mxu0 %v1383
        %1459 = vmatprep.subr.mxu0 0.0
        %1460 = vmatpush1.msra.mxu0 %v1384
        %1461 = vmatprep.subr.mxu0 0.0
        %1462 = vmatpush1.msra.mxu0 %v1385
        %1463 = vmatprep.subr.mxu0 0.0
        %1464 = vmatpush1.msra.mxu0 %v1386
        %1465 = vmatprep.subr.mxu0 0.0
        %1466 = vmatpush1.msra.mxu0 %v1387
        %1467 = vmatprep.subr.mxu0 0.0
        %1468 = vmatpush1.msra.mxu0 %v1388
        %1469 = vmatprep.subr.mxu0 0.0
        %1470 = vmatpush1.msra.mxu0 %v1389
        %1471 = vmatprep.subr.mxu0 0.0
        %1472 = vmatpush1.msra.mxu0 %v1390
        %1473 = vmatprep.subr.mxu0 0.0
        %1474 = vmatpush1.msra.mxu0 %v1391
        %1475 = vmatprep.subr.mxu0 0.0
        %1476 = vmatpush1.msra.mxu0 %v1392
        %1477 = vmatprep.subr.mxu0 0.0
        %1478 = vmatpush1.msra.mxu0 %v1393
        %1479 = vmatprep.subr.mxu0 0.0
        %1480 = vmatpush1.msra.mxu0 %v1394
        %1481 = vmatprep.subr.mxu0 0.0
        %1482 = vmatpush1.msra.mxu0 %v1395
        %1483 = vmatprep.subr.mxu0 0.0
        %1484 = vmatpush1.msra.mxu0 %v1396
        %1485 = vmatprep.subr.mxu0 0.0
        %1486 = vmatpush1.msra.mxu0 %v1397
        %1487 = vmatprep.subr.mxu0 0.0
        %1488 = vmatpush1.msra.mxu0 %v1398
        %1489 = vmatprep.subr.mxu0 0.0
        %1490 = vmatpush1.msra.mxu0 %v1399
        %1491 = vmatprep.subr.mxu0 0.0
        %1492 = vmatpush1.msra.mxu0 %v1400
        %1493 = vmatprep.subr.mxu0 0.0
        %1494 = vmatpush1.msra.mxu0 %v1401
        %1495 = vmatprep.subr.mxu0 0.0
        %1496 = vmatpush1.msra.mxu0 %v1402
        %1497 = vmatprep.subr.mxu0 0.0
        %1498 = vmatpush1.msra.mxu0 %v1403
        %1499 = vmatprep.subr.mxu0 0.0
        %1500 = vmatpush1.msra.mxu0 %v1404
        %1501 = vmatprep.subr.mxu0 0.0
        %1502 = vmatpush1.msra.mxu0 %v1405
        %1503 = vmatprep.subr.mxu0 0.0
        %1504 = vmatpush1.msra.mxu0 %v1406
        %1505 = vmatprep.subr.mxu0 0.0
        %1506 = vmatpush1.msra.mxu0 %v1407
        %1507 = vmatprep.subr.mxu0 0.0
        %1508 = vmatpush1.msra.mxu0 %v1408
        %1509 = vmatprep.subr.mxu0 0.0
        %1510 = vmatpush1.msra.mxu0 %v1409
        %1511 = vmatprep.subr.mxu0 0.0
        %1512 = vmatpush1.msra.mxu0 %v1410
        %1513 = vmatprep.subr.mxu0 0.0
        %1514 = vmatpush1.msra.mxu0 %v1411
        %1515 = vmatprep.mubr.f32.mxu0 %v1377
        %1516 = vmatmul.mubr.f32.gmra.mrb[0].mxu0 %v1376
        %v1517 = vpop.f32.mrb[0].mxu0
        %v1518 = vadd.f32 %v1449, %v1517
        %v1519 = vpop.f32.mrb[0].mxu0
        %1520 = vdwg.mxu0
        %1521 = vmatprep.subr.mxu0 0.0
        %1522 = vmatpush1.msra.mxu0 %v1412
        %1523 = vmatprep.subr.mxu0 0.0
        %1524 = vmatpush1.msra.mxu0 %v1413
        %1525 = vmatprep.subr.mxu0 0.0
        %1526 = vmatpush1.msra.mxu0 %v1414
        %1527 = vmatprep.subr.mxu0 0.0
        %1528 = vmatpush1.msra.mxu0 %v1415
        %1529 = vmatprep.subr.mxu0 0.0
        %1530 = vmatpush1.msra.mxu0 %v1416
        %1531 = vmatprep.subr.mxu0 0.0
        %1532 = vmatpush1.msra.mxu0 %v1417
        %1533 = vmatprep.subr.mxu0 0.0
        %1534 = vmatpush1.msra.mxu0 %v1418
        %1535 = vmatprep.subr.mxu0 0.0
        %1536 = vmatpush1.msra.mxu0 %v1419
        %1537 = vmatprep.subr.mxu0 0.0
        %1538 = vmatpush1.msra.mxu0 %v1420
        %1539 = vmatprep.subr.mxu0 0.0
        %1540 = vmatpush1.msra.mxu0 %v1421
        %1541 = vmatprep.subr.mxu0 0.0
        %1542 = vmatpush1.msra.mxu0 %v1422
        %1543 = vmatprep.subr.mxu0 0.0
        %1544 = vmatpush1.msra.mxu0 %v1423
        %1545 = vmatprep.subr.mxu0 0.0
        %1546 = vmatpush1.msra.mxu0 %v1424
        %1547 = vmatprep.subr.mxu0 0.0
        %1548 = vmatpush1.msra.mxu0 %v1425
        %1549 = vmatprep.subr.mxu0 0.0
        %1550 = vmatpush1.msra.mxu0 %v1426
        %1551 = vmatprep.subr.mxu0 0.0
        %1552 = vmatpush1.msra.mxu0 %v1427
        %1553 = vmatprep.subr.mxu0 0.0
        %1554 = vmatpush1.msra.mxu0 %v1428
        %1555 = vmatprep.subr.mxu0 0.0
        %1556 = vmatpush1.msra.mxu0 %v1429
        %1557 = vmatprep.subr.mxu0 0.0
        %1558 = vmatpush1.msra.mxu0 %v1430
        %1559 = vmatprep.subr.mxu0 0.0
        %1560 = vmatpush1.msra.mxu0 %v1431
        %1561 = vmatprep.subr.mxu0 0.0
        %1562 = vmatpush1.msra.mxu0 %v1432
        %1563 = vmatprep.subr.mxu0 0.0
        %1564 = vmatpush1.msra.mxu0 %v1433
        %1565 = vmatprep.subr.mxu0 0.0
        %1566 = vmatpush1.msra.mxu0 %v1434
        %1567 = vmatprep.subr.mxu0 0.0
        %1568 = vmatpush1.msra.mxu0 %v1435
        %1569 = vmatprep.subr.mxu0 0.0
        %1570 = vmatpush1.msra.mxu0 %v1436
        %1571 = vmatprep.subr.mxu0 0.0
        %1572 = vmatpush1.msra.mxu0 %v1437
        %1573 = vmatprep.subr.mxu0 0.0
        %1574 = vmatpush1.msra.mxu0 %v1438
        %1575 = vmatprep.subr.mxu0 0.0
        %1576 = vmatpush1.msra.mxu0 %v1439
        %1577 = vmatprep.subr.mxu0 0.0
        %1578 = vmatpush1.msra.mxu0 %v1440
        %1579 = vmatprep.subr.mxu0 0.0
        %1580 = vmatpush1.msra.mxu0 %v1441
        %1581 = vmatprep.subr.mxu0 0.0
        %1582 = vmatpush1.msra.mxu0 %v1442
        %1583 = vmatprep.subr.mxu0 0.0
        %1584 = vmatpush1.msra.mxu0 %v1443
        %1585 = vmatprep.mubr.f32.mxu0 %v1379
        %1586 = vmatmul.mubr.f32.gmra.mrb[0].mxu0 %v1378
        %v1587 = vpop.f32.mrb[0].mxu0
        %v1588 = vadd.f32 %v1518, %v1587
        %v1589 = vpop.f32.mrb[0].mxu0
        %1590 = vdwg.mxu0
        %v1591 = vadd.f32 %v1588, %v1088
        %1592 = vst [vmem:[%s569] sm:$0xff] %v1591
        %s1593 = sand.u32 %s341, 1
        %s1594 = scalar_lea.sflag [#allocation4], %s1593
        %s1595 = sand.u32 %s341, 1
        %s1596 = smul.addr %s1595, 8
        %s1597 = scalar_lea.vmem [#allocation14], %s1596
        // Predicated region
        $region112: #{tpu_custom_call.1} parent=75 // pred_check
          %p1598 = pneg %p351
        $region113: #{tpu_custom_call.1} parent=75 // pred_check_branch
          %1600 = sbr.rel (%p1598) target = $region115
        $region114: #{tpu_custom_call.1} parent=75 // pred_region
          %s1602 = ssub.s32 128, 128
          %1603 = vsyncadd %s1594, %s1602
          %s1604 = smul.addr %s34, 128
          %s1605 = scalar_lea.hbm %s14, %s1604
          %s1607 = sshll.u32 %s1597, 4
          %s1608 = int_to_ptr.vmem [resolvable:$true] %s1607
          %1610 = dma.vmem_to_hbm [thread:$0]  %s1608, 128, %s1605, %s1594
        $region115: #{tpu_custom_call.1} parent=75 // pred_fallthru
          _
      $region76: #{tpu_custom_call.1} parent=5 // pred_fallthru
        _
      %p1611 = scmp.le.s32.totalorder 2, %s29
      // Predicated region
      $region116: #{tpu_custom_call.1} parent=5 // pred_check
        %p1612 = pneg %p1611
      $region117: #{tpu_custom_call.1} parent=5 // pred_check_branch
        %1614 = sbr.rel (%p1612) target = $region119
      $region118: #{tpu_custom_call.1} parent=5 // pred_region
        %s1615 = ssub.s32 %s29, 2
        // Predicated region
        $region120: #{tpu_custom_call.1} parent=118 // pred_check
          %p1616 = pneg %p357
        $region121: #{tpu_custom_call.1} parent=118 // pred_check_branch
          %1618 = sbr.rel (%p1616) target = $region123
        $region122: #{tpu_custom_call.1} parent=118 // pred_region
          %s1619 = sand.u32 %s342, 1
          %s1620 = scalar_lea.sflag [#allocation4], %s1619
          %s1621 = sand.u32 %s342, 1
          %s1622 = smul.addr %s1621, 8
          %s1623 = scalar_lea.vmem [#allocation14], %s1622
          %1624 = dma.done %s1620, 128
        $region123: #{tpu_custom_call.1} parent=118 // pred_fallthru
          _
      $region119: #{tpu_custom_call.1} parent=5 // pred_fallthru
        _
    $region6: #{tpu_custom_call.1} parent=1 // loop_footer
      %s33 = sadd.s32 1, %s29
    $region7: #{tpu_custom_call.1} parent=1 // loop_footer_branch
      %28 = sbr.rel target = $region3
    $region8: #{tpu_custom_call.1} parent=1 // loop_exit
      _
    %1625 = vsyncpa [#allocation3], 1
    %s1626 = scalar_lea.sflag [#allocation3], 1
    %1627 = vsyncpa %s1626, 1
    %1628 = vsyncpa [#allocation6], 1
    %1629 = vsyncpa [#allocation9], 1
    %1630 = vsyncpa [#allocation12], 1
    %1631 = vsyncpa [#allocation4], 1
    %s1632 = scalar_lea.sflag [#allocation4], 1
    %1633 = vsyncpa %s1632, 1

</llo_original>
